<compile_context>
chip_gen: v7x
topology: tpu7x:2x2x1
jax: 0.10.0
libtpu: 0.0.40
codegen_flags: <defaults>
</compile_context>

<pallas_src>
import jax
import jax.numpy as jnp
from jax import lax
from jax.experimental import pallas as pl
from jax.experimental.pallas import tpu as pltpu


def lstm_kernel(x_ref, w_ih_ref, w_hh_ref, b_ref, w_fc_ref, b_fc_ref,
                out_ref, xg_scr, h_scr, c_scr):
    # x_ref:    (T, Bp, IN)   time-major, batch padded to sublane multiple
    # w_ih_ref: (IN, 4H)      input->gates weight (transposed vs PyTorch)
    # w_hh_ref: (H, 4H)       hidden->gates weight (transposed vs PyTorch)
    # b_ref:    (1, 4H)       b_ih + b_hh combined
    # w_fc_ref: (H, Op)       fc weight, zero-padded to lane-dense Op
    # b_fc_ref: (1, Op)       fc bias, zero-padded
    # out_ref:  (Bp, Op)
    # xg_scr:   (T, Bp, 4H)   precomputed input projection (VMEM scratch)
    # h_scr, c_scr: (Bp, H)   recurrent state (VMEM scratch)
    T, Bp, IN = x_ref.shape
    H = h_scr.shape[1]
    G4 = 4 * H

    # ---- Hoisted input projection: xg[t] = x[t] @ W_ih + b for all t -------
    # IN is tiny (1), so this is a sum of lane-broadcast multiplies on the
    # VPU; it has no serial dependence and pipelines entirely before the loop.
    x_all = x_ref[...]                                   # (T, Bp, IN)
    xg = x_all[:, :, 0:1] * w_ih_ref[0:1, :]             # (T, Bp, 4H)
    for k in range(1, IN):                               # static tiny loop
        xg = xg + x_all[:, :, k:k + 1] * w_ih_ref[k:k + 1, :]
    xg_scr[...] = xg + b_ref[...]                        # bias folded in once

    h_scr[...] = jnp.zeros_like(h_scr)
    c_scr[...] = jnp.zeros_like(c_scr)

    w_hh = w_hh_ref[...]                                 # hoist weight load

    def step(t, carry):
        # Serial path: one MXU dot + one add + 2 full-width EUP ops.
        gates = xg_scr[t] + jnp.dot(h_scr[...], w_hh,
                                    preferred_element_type=jnp.float32)
        sig = jax.nn.sigmoid(gates)                      # full (Bp, 4H) vreg
        th = jnp.tanh(gates)                             # full (Bp, 4H) vreg
        # PyTorch gate order: i, f, g, o  (lane slices of the full-width acts)
        i_g = sig[:, 0 * H:1 * H]
        f_g = sig[:, 1 * H:2 * H]
        g_g = th[:, 2 * H:3 * H]
        o_g = sig[:, 3 * H:4 * H]
        c_new = f_g * c_scr[...] + i_g * g_g
        h_new = o_g * jnp.tanh(c_new)
        c_scr[...] = c_new
        h_scr[...] = h_new
        return carry

    # T is small and static -> full unroll for cross-iteration scheduling.
    lax.fori_loop(0, T, step, 0, unroll=True)

    # Final FC on the last hidden state; Op is lane-dense (128-wide) so the
    # store is an unmasked vst. Padded columns are zero by construction.
    out_ref[...] = (jnp.dot(h_scr[...], w_fc_ref[...],
                            preferred_element_type=jnp.float32)
                    + b_fc_ref[...])


def lstm_model_forward(x, params):
    """x: (B, T, input_size) float32, batch-first like PyTorch."""
    B, T, IN = x.shape
    H = params["w_hh"].shape[1]          # w_hh: (4H, H) PyTorch layout
    O = params["w_fc"].shape[0]          # w_fc: (O, H)  PyTorch layout

    SUBLANE, LANE = 8, 128
    Bp = ((B + SUBLANE - 1) // SUBLANE) * SUBLANE        # pad batch to sublanes
    Op = ((O + LANE - 1) // LANE) * LANE                 # pad out cols to lanes

    # Glue: pad batch, go time-major, transpose weights for row-major matmuls.
    x_p = jnp.zeros((Bp, T, IN), jnp.float32).at[:B].set(x.astype(jnp.float32))
    x_tm = jnp.transpose(x_p, (1, 0, 2))                              # (T, Bp, IN)
    w_ih_t = jnp.transpose(params["w_ih"]).astype(jnp.float32)        # (IN, 4H)
    w_hh_t = jnp.transpose(params["w_hh"]).astype(jnp.float32)        # (H, 4H)
    b = (params["b_ih"] + params["b_hh"]).reshape(1, 4 * H).astype(jnp.float32)
    w_fc_t = jnp.zeros((H, Op), jnp.float32).at[:, :O].set(
        jnp.transpose(params["w_fc"]).astype(jnp.float32))            # (H, Op)
    b_fc = jnp.zeros((1, Op), jnp.float32).at[:, :O].set(
        params["b_fc"].reshape(1, O).astype(jnp.float32))             # (1, Op)

    out_p = pl.pallas_call(
        lstm_kernel,
        out_shape=jax.ShapeDtypeStruct((Bp, Op), jnp.float32),
        scratch_shapes=[
            pltpu.VMEM((T, Bp, 4 * H), jnp.float32),   # precomputed x gates
            pltpu.VMEM((Bp, H), jnp.float32),          # h
            pltpu.VMEM((Bp, H), jnp.float32),          # c
        ],
    )(x_tm, w_ih_t, w_hh_t, b, w_fc_t, b_fc)
    return out_p[:B, :O]


def lstm_model_ref(x, params):
    """Pure-JAX reference matching PyTorch nn.LSTM + Linear semantics."""
    B, T, IN = x.shape
    H = params["w_hh"].shape[1]
    h = jnp.zeros((B, H), jnp.float32)
    c = jnp.zeros((B, H), jnp.float32)
    w_ih_t = params["w_ih"].T
    w_hh_t = params["w_hh"].T
    b = params["b_ih"] + params["b_hh"]
    for t in range(T):
        gates = x[:, t, :] @ w_ih_t + h @ w_hh_t + b
        i_g = jax.nn.sigmoid(gates[:, 0 * H:1 * H])
        f_g = jax.nn.sigmoid(gates[:, 1 * H:2 * H])
        g_g = jnp.tanh(gates[:, 2 * H:3 * H])
        o_g = jax.nn.sigmoid(gates[:, 3 * H:4 * H])
        c = f_g * c + i_g * g_g
        h = o_g * jnp.tanh(c)
    return h @ params["w_fc"].T + params["b_fc"]


def init_params(key, input_size=1, hidden_size=32, output_size=1):
    """Deterministic synthetic params with PyTorch-style uniform init."""
    ks = jax.random.split(key, 6)
    bound = 1.0 / jnp.sqrt(hidden_size)
    u = lambda k, shape: jax.random.uniform(k, shape, jnp.float32, -bound, bound)
    return {
        "w_ih": u(ks[0], (4 * hidden_size, input_size)),
        "w_hh": u(ks[1], (4 * hidden_size, hidden_size)),
        "b_ih": u(ks[2], (4 * hidden_size,)),
        "b_hh": u(ks[3], (4 * hidden_size,)),
        "w_fc": u(ks[4], (output_size, hidden_size)),
        "b_fc": u(ks[5], (output_size,)),
    }


if __name__ == "__main__":
    key = jax.random.PRNGKey(0)
    k_param, k_x = jax.random.split(key)

    B, T, IN, H, O = 2, 8, 1, 32, 1
    params = init_params(k_param, IN, H, O)
    x = jax.random.normal(k_x, (B, T, IN), jnp.float32)

    out = lstm_model_forward(x, params)
    out = jax.block_until_ready(out)

    ref = lstm_model_ref(x, params)
    assert out.shape == (B, O)
    assert jnp.allclose(out, ref, atol=1e-3, rtol=1e-3), (out, ref)

    print("KERNEL_OK")
</pallas_src>

<mosaic_0001>
module attributes {stable_mosaic.version = 11 : i64} {
  func.func @lstm_kernel(%arg0: memref<8x8x1xf32, #tpu.memory_space<vmem>>, %arg1: memref<1x128xf32, #tpu.memory_space<vmem>>, %arg2: memref<32x128xf32, #tpu.memory_space<vmem>>, %arg3: memref<1x128xf32, #tpu.memory_space<vmem>>, %arg4: memref<32x128xf32, #tpu.memory_space<vmem>>, %arg5: memref<1x128xf32, #tpu.memory_space<vmem>>, %arg6: memref<8x128xf32, #tpu.memory_space<vmem>>, %arg7: memref<8x8x128xf32, #tpu.memory_space<vmem>>, %arg8: memref<8x32xf32, #tpu.memory_space<vmem>>, %arg9: memref<8x32xf32, #tpu.memory_space<vmem>>) attributes {dimension_semantics = [], scalar_prefetch = 0 : i64, scratch_operands = 3 : i64, tpu.core_type = #tpu.core_type<tc>} {
    %c0 = arith.constant 0 : index
    %c0_0 = arith.constant 0 : index
    %c0_1 = arith.constant 0 : index
    %0 = vector.load %arg0[%c0, %c0_0, %c0_1] : memref<8x8x1xf32, #tpu.memory_space<vmem>>, vector<8x8x1xf32>
    %c0_2 = arith.constant 0 : index
    %c0_3 = arith.constant 0 : index
    %1 = vector.load %arg1[%c0_2, %c0_3] : memref<1x128xf32, #tpu.memory_space<vmem>>, vector<1x128xf32>
    %2 = vector.shape_cast %1 : vector<1x128xf32> to vector<1x1x128xf32>
    %3 = vector.broadcast %0 : vector<8x8x1xf32> to vector<8x8x128xf32>
    %4 = vector.broadcast %2 : vector<1x1x128xf32> to vector<8x8x128xf32>
    %5 = arith.mulf %3, %4 : vector<8x8x128xf32>
    %c0_4 = arith.constant 0 : index
    %c0_5 = arith.constant 0 : index
    %6 = vector.load %arg3[%c0_4, %c0_5] : memref<1x128xf32, #tpu.memory_space<vmem>>, vector<1x128xf32>
    %7 = vector.shape_cast %6 : vector<1x128xf32> to vector<1x1x128xf32>
    %8 = vector.broadcast %7 : vector<1x1x128xf32> to vector<8x8x128xf32>
    %9 = arith.addf %5, %8 : vector<8x8x128xf32>
    %c0_6 = arith.constant 0 : index
    %c0_7 = arith.constant 0 : index
    %c0_8 = arith.constant 0 : index
    %10 = vector.load %arg7[%c0_6, %c0_7, %c0_8] : memref<8x8x128xf32, #tpu.memory_space<vmem>>, vector<8x8x128xf32>
    tpu.vector_store %arg7[%c0_6, %c0_7, %c0_8], %9 {strides = array<i32>} : memref<8x8x128xf32, #tpu.memory_space<vmem>>, vector<8x8x128xf32>,
    %cst = arith.constant 0.000000e+00 : f32
    %11 = vector.broadcast %cst : f32 to vector<8x32xf32>
    %c0_9 = arith.constant 0 : index
    %c0_10 = arith.constant 0 : index
    %12 = vector.load %arg8[%c0_9, %c0_10] : memref<8x32xf32, #tpu.memory_space<vmem>>, vector<8x32xf32>
    tpu.vector_store %arg8[%c0_9, %c0_10], %11 {strides = array<i32>} : memref<8x32xf32, #tpu.memory_space<vmem>>, vector<8x32xf32>,
    %cst_11 = arith.constant 0.000000e+00 : f32
    %13 = vector.broadcast %cst_11 : f32 to vector<8x32xf32>
    %c0_12 = arith.constant 0 : index
    %c0_13 = arith.constant 0 : index
    %14 = vector.load %arg9[%c0_12, %c0_13] : memref<8x32xf32, #tpu.memory_space<vmem>>, vector<8x32xf32>
    tpu.vector_store %arg9[%c0_12, %c0_13], %13 {strides = array<i32>} : memref<8x32xf32, #tpu.memory_space<vmem>>, vector<8x32xf32>,
    %c0_14 = arith.constant 0 : index
    %c0_15 = arith.constant 0 : index
    %15 = vector.load %arg2[%c0_14, %c0_15] : memref<32x128xf32, #tpu.memory_space<vmem>>, vector<32x128xf32>
    %c0_i32 = arith.constant 0 : i32
    %16 = arith.index_cast %c0_i32 : i32 to index
    %c0_16 = arith.constant 0 : index
    %c0_17 = arith.constant 0 : index
    %17 = vector.load %arg7[%16, %c0_16, %c0_17] : memref<8x8x128xf32, #tpu.memory_space<vmem>>, vector<1x8x128xf32>
    %18 = vector.shape_cast %17 : vector<1x8x128xf32> to vector<8x128xf32>
    %c0_18 = arith.constant 0 : index
    %c0_19 = arith.constant 0 : index
    %19 = vector.load %arg8[%c0_18, %c0_19] : memref<8x32xf32, #tpu.memory_space<vmem>>, vector<8x32xf32>
    %cst_20 = arith.constant dense<0.000000e+00> : vector<8x128xf32>
    %20 = tpu.matmul %19, %15, %cst_20 {dimension_numbers = #tpu.dot_dimension_numbers<[1], [0], [0], [1], [0, 0, 1, 1], [], []>} : vector<8x32xf32>, vector<32x128xf32>, vector<8x128xf32> -> vector<8x128xf32>
    %21 = arith.addf %18, %20 : vector<8x128xf32>
    %22 = arith.negf %21 : vector<8x128xf32>
    %23 = math.exp %22 : vector<8x128xf32>
    %cst_21 = arith.constant 1.000000e+00 : f32
    %24 = vector.broadcast %cst_21 : f32 to vector<8x128xf32>
    %25 = arith.addf %24, %23 : vector<8x128xf32>
    %26 = arith.divf %24, %25 : vector<8x128xf32>
    %27 = math.tanh %21 : vector<8x128xf32>
    %28 = vector.extract_strided_slice %26 {offsets = [0, 0], sizes = [8, 32], strides = [1, 1]} : vector<8x128xf32> to vector<8x32xf32>
    %29 = vector.extract_strided_slice %26 {offsets = [0, 32], sizes = [8, 32], strides = [1, 1]} : vector<8x128xf32> to vector<8x32xf32>
    %30 = vector.extract_strided_slice %27 {offsets = [0, 64], sizes = [8, 32], strides = [1, 1]} : vector<8x128xf32> to vector<8x32xf32>
    %31 = vector.extract_strided_slice %26 {offsets = [0, 96], sizes = [8, 32], strides = [1, 1]} : vector<8x128xf32> to vector<8x32xf32>
    %c0_22 = arith.constant 0 : index
    %c0_23 = arith.constant 0 : index
    %32 = vector.load %arg9[%c0_22, %c0_23] : memref<8x32xf32, #tpu.memory_space<vmem>>, vector<8x32xf32>
    %33 = arith.mulf %29, %32 : vector<8x32xf32>
    %34 = arith.mulf %28, %30 : vector<8x32xf32>
    %35 = arith.addf %33, %34 : vector<8x32xf32>
    %36 = math.tanh %35 : vector<8x32xf32>
    %37 = arith.mulf %31, %36 : vector<8x32xf32>
    %c0_24 = arith.constant 0 : index
    %c0_25 = arith.constant 0 : index
    %38 = vector.load %arg9[%c0_24, %c0_25] : memref<8x32xf32, #tpu.memory_space<vmem>>, vector<8x32xf32>
    tpu.vector_store %arg9[%c0_24, %c0_25], %35 {strides = array<i32>} : memref<8x32xf32, #tpu.memory_space<vmem>>, vector<8x32xf32>,
    %c0_26 = arith.constant 0 : index
    %c0_27 = arith.constant 0 : index
    %39 = vector.load %arg8[%c0_26, %c0_27] : memref<8x32xf32, #tpu.memory_space<vmem>>, vector<8x32xf32>
    tpu.vector_store %arg8[%c0_26, %c0_27], %37 {strides = array<i32>} : memref<8x32xf32, #tpu.memory_space<vmem>>, vector<8x32xf32>,
    %c1_i32 = arith.constant 1 : i32
    %40 = arith.index_cast %c1_i32 : i32 to index
    %c0_28 = arith.constant 0 : index
    %c0_29 = arith.constant 0 : index
    %41 = vector.load %arg7[%40, %c0_28, %c0_29] : memref<8x8x128xf32, #tpu.memory_space<vmem>>, vector<1x8x128xf32>
    %42 = vector.shape_cast %41 : vector<1x8x128xf32> to vector<8x128xf32>
    %c0_30 = arith.constant 0 : index
    %c0_31 = arith.constant 0 : index
    %43 = vector.load %arg8[%c0_30, %c0_31] : memref<8x32xf32, #tpu.memory_space<vmem>>, vector<8x32xf32>
    %cst_32 = arith.constant dense<0.000000e+00> : vector<8x128xf32>
    %44 = tpu.matmul %43, %15, %cst_32 {dimension_numbers = #tpu.dot_dimension_numbers<[1], [0], [0], [1], [0, 0, 1, 1], [], []>} : vector<8x32xf32>, vector<32x128xf32>, vector<8x128xf32> -> vector<8x128xf32>
    %45 = arith.addf %42, %44 : vector<8x128xf32>
    %46 = arith.negf %45 : vector<8x128xf32>
    %47 = math.exp %46 : vector<8x128xf32>
    %cst_33 = arith.constant 1.000000e+00 : f32
    %48 = vector.broadcast %cst_33 : f32 to vector<8x128xf32>
    %49 = arith.addf %48, %47 : vector<8x128xf32>
    %50 = arith.divf %48, %49 : vector<8x128xf32>
    %51 = math.tanh %45 : vector<8x128xf32>
    %52 = vector.extract_strided_slice %50 {offsets = [0, 0], sizes = [8, 32], strides = [1, 1]} : vector<8x128xf32> to vector<8x32xf32>
    %53 = vector.extract_strided_slice %50 {offsets = [0, 32], sizes = [8, 32], strides = [1, 1]} : vector<8x128xf32> to vector<8x32xf32>
    %54 = vector.extract_strided_slice %51 {offsets = [0, 64], sizes = [8, 32], strides = [1, 1]} : vector<8x128xf32> to vector<8x32xf32>
    %55 = vector.extract_strided_slice %50 {offsets = [0, 96], sizes = [8, 32], strides = [1, 1]} : vector<8x128xf32> to vector<8x32xf32>
    %c0_34 = arith.constant 0 : index
    %c0_35 = arith.constant 0 : index
    %56 = vector.load %arg9[%c0_34, %c0_35] : memref<8x32xf32, #tpu.memory_space<vmem>>, vector<8x32xf32>
    %57 = arith.mulf %53, %56 : vector<8x32xf32>
    %58 = arith.mulf %52, %54 : vector<8x32xf32>
    %59 = arith.addf %57, %58 : vector<8x32xf32>
    %60 = math.tanh %59 : vector<8x32xf32>
    %61 = arith.mulf %55, %60 : vector<8x32xf32>
    %c0_36 = arith.constant 0 : index
    %c0_37 = arith.constant 0 : index
    %62 = vector.load %arg9[%c0_36, %c0_37] : memref<8x32xf32, #tpu.memory_space<vmem>>, vector<8x32xf32>
    tpu.vector_store %arg9[%c0_36, %c0_37], %59 {strides = array<i32>} : memref<8x32xf32, #tpu.memory_space<vmem>>, vector<8x32xf32>,
    %c0_38 = arith.constant 0 : index
    %c0_39 = arith.constant 0 : index
    %63 = vector.load %arg8[%c0_38, %c0_39] : memref<8x32xf32, #tpu.memory_space<vmem>>, vector<8x32xf32>
    tpu.vector_store %arg8[%c0_38, %c0_39], %61 {strides = array<i32>} : memref<8x32xf32, #tpu.memory_space<vmem>>, vector<8x32xf32>,
    %c2_i32 = arith.constant 2 : i32
    %64 = arith.index_cast %c2_i32 : i32 to index
    %c0_40 = arith.constant 0 : index
    %c0_41 = arith.constant 0 : index
    %65 = vector.load %arg7[%64, %c0_40, %c0_41] : memref<8x8x128xf32, #tpu.memory_space<vmem>>, vector<1x8x128xf32>
    %66 = vector.shape_cast %65 : vector<1x8x128xf32> to vector<8x128xf32>
    %c0_42 = arith.constant 0 : index
    %c0_43 = arith.constant 0 : index
    %67 = vector.load %arg8[%c0_42, %c0_43] : memref<8x32xf32, #tpu.memory_space<vmem>>, vector<8x32xf32>
    %cst_44 = arith.constant dense<0.000000e+00> : vector<8x128xf32>
    %68 = tpu.matmul %67, %15, %cst_44 {dimension_numbers = #tpu.dot_dimension_numbers<[1], [0], [0], [1], [0, 0, 1, 1], [], []>} : vector<8x32xf32>, vector<32x128xf32>, vector<8x128xf32> -> vector<8x128xf32>
    %69 = arith.addf %66, %68 : vector<8x128xf32>
    %70 = arith.negf %69 : vector<8x128xf32>
    %71 = math.exp %70 : vector<8x128xf32>
    %cst_45 = arith.constant 1.000000e+00 : f32
    %72 = vector.broadcast %cst_45 : f32 to vector<8x128xf32>
    %73 = arith.addf %72, %71 : vector<8x128xf32>
    %74 = arith.divf %72, %73 : vector<8x128xf32>
    %75 = math.tanh %69 : vector<8x128xf32>
    %76 = vector.extract_strided_slice %74 {offsets = [0, 0], sizes = [8, 32], strides = [1, 1]} : vector<8x128xf32> to vector<8x32xf32>
    %77 = vector.extract_strided_slice %74 {offsets = [0, 32], sizes = [8, 32], strides = [1, 1]} : vector<8x128xf32> to vector<8x32xf32>
    %78 = vector.extract_strided_slice %75 {offsets = [0, 64], sizes = [8, 32], strides = [1, 1]} : vector<8x128xf32> to vector<8x32xf32>
    %79 = vector.extract_strided_slice %74 {offsets = [0, 96], sizes = [8, 32], strides = [1, 1]} : vector<8x128xf32> to vector<8x32xf32>
    %c0_46 = arith.constant 0 : index
    %c0_47 = arith.constant 0 : index
    %80 = vector.load %arg9[%c0_46, %c0_47] : memref<8x32xf32, #tpu.memory_space<vmem>>, vector<8x32xf32>
    %81 = arith.mulf %77, %80 : vector<8x32xf32>
    %82 = arith.mulf %76, %78 : vector<8x32xf32>
    %83 = arith.addf %81, %82 : vector<8x32xf32>
    %84 = math.tanh %83 : vector<8x32xf32>
    %85 = arith.mulf %79, %84 : vector<8x32xf32>
    %c0_48 = arith.constant 0 : index
    %c0_49 = arith.constant 0 : index
    %86 = vector.load %arg9[%c0_48, %c0_49] : memref<8x32xf32, #tpu.memory_space<vmem>>, vector<8x32xf32>
    tpu.vector_store %arg9[%c0_48, %c0_49], %83 {strides = array<i32>} : memref<8x32xf32, #tpu.memory_space<vmem>>, vector<8x32xf32>,
    %c0_50 = arith.constant 0 : index
    %c0_51 = arith.constant 0 : index
    %87 = vector.load %arg8[%c0_50, %c0_51] : memref<8x32xf32, #tpu.memory_space<vmem>>, vector<8x32xf32>
    tpu.vector_store %arg8[%c0_50, %c0_51], %85 {strides = array<i32>} : memref<8x32xf32, #tpu.memory_space<vmem>>, vector<8x32xf32>,
    %c3_i32 = arith.constant 3 : i32
    %88 = arith.index_cast %c3_i32 : i32 to index
    %c0_52 = arith.constant 0 : index
    %c0_53 = arith.constant 0 : index
    %89 = vector.load %arg7[%88, %c0_52, %c0_53] : memref<8x8x128xf32, #tpu.memory_space<vmem>>, vector<1x8x128xf32>
    %90 = vector.shape_cast %89 : vector<1x8x128xf32> to vector<8x128xf32>
    %c0_54 = arith.constant 0 : index
    %c0_55 = arith.constant 0 : index
    %91 = vector.load %arg8[%c0_54, %c0_55] : memref<8x32xf32, #tpu.memory_space<vmem>>, vector<8x32xf32>
    %cst_56 = arith.constant dense<0.000000e+00> : vector<8x128xf32>
    %92 = tpu.matmul %91, %15, %cst_56 {dimension_numbers = #tpu.dot_dimension_numbers<[1], [0], [0], [1], [0, 0, 1, 1], [], []>} : vector<8x32xf32>, vector<32x128xf32>, vector<8x128xf32> -> vector<8x128xf32>
    %93 = arith.addf %90, %92 : vector<8x128xf32>
    %94 = arith.negf %93 : vector<8x128xf32>
    %95 = math.exp %94 : vector<8x128xf32>
    %cst_57 = arith.constant 1.000000e+00 : f32
    %96 = vector.broadcast %cst_57 : f32 to vector<8x128xf32>
    %97 = arith.addf %96, %95 : vector<8x128xf32>
    %98 = arith.divf %96, %97 : vector<8x128xf32>
    %99 = math.tanh %93 : vector<8x128xf32>
    %100 = vector.extract_strided_slice %98 {offsets = [0, 0], sizes = [8, 32], strides = [1, 1]} : vector<8x128xf32> to vector<8x32xf32>
    %101 = vector.extract_strided_slice %98 {offsets = [0, 32], sizes = [8, 32], strides = [1, 1]} : vector<8x128xf32> to vector<8x32xf32>
    %102 = vector.extract_strided_slice %99 {offsets = [0, 64], sizes = [8, 32], strides = [1, 1]} : vector<8x128xf32> to vector<8x32xf32>
    %103 = vector.extract_strided_slice %98 {offsets = [0, 96], sizes = [8, 32], strides = [1, 1]} : vector<8x128xf32> to vector<8x32xf32>
    %c0_58 = arith.constant 0 : index
    %c0_59 = arith.constant 0 : index
    %104 = vector.load %arg9[%c0_58, %c0_59] : memref<8x32xf32, #tpu.memory_space<vmem>>, vector<8x32xf32>
    %105 = arith.mulf %101, %104 : vector<8x32xf32>
    %106 = arith.mulf %100, %102 : vector<8x32xf32>
    %107 = arith.addf %105, %106 : vector<8x32xf32>
    %108 = math.tanh %107 : vector<8x32xf32>
    %109 = arith.mulf %103, %108 : vector<8x32xf32>
    %c0_60 = arith.constant 0 : index
    %c0_61 = arith.constant 0 : index
    %110 = vector.load %arg9[%c0_60, %c0_61] : memref<8x32xf32, #tpu.memory_space<vmem>>, vector<8x32xf32>
    tpu.vector_store %arg9[%c0_60, %c0_61], %107 {strides = array<i32>} : memref<8x32xf32, #tpu.memory_space<vmem>>, vector<8x32xf32>,
    %c0_62 = arith.constant 0 : index
    %c0_63 = arith.constant 0 : index
    %111 = vector.load %arg8[%c0_62, %c0_63] : memref<8x32xf32, #tpu.memory_space<vmem>>, vector<8x32xf32>
    tpu.vector_store %arg8[%c0_62, %c0_63], %109 {strides = array<i32>} : memref<8x32xf32, #tpu.memory_space<vmem>>, vector<8x32xf32>,
    %c4_i32 = arith.constant 4 : i32
    %112 = arith.index_cast %c4_i32 : i32 to index
    %c0_64 = arith.constant 0 : index
    %c0_65 = arith.constant 0 : index
    %113 = vector.load %arg7[%112, %c0_64, %c0_65] : memref<8x8x128xf32, #tpu.memory_space<vmem>>, vector<1x8x128xf32>
    %114 = vector.shape_cast %113 : vector<1x8x128xf32> to vector<8x128xf32>
    %c0_66 = arith.constant 0 : index
    %c0_67 = arith.constant 0 : index
    %115 = vector.load %arg8[%c0_66, %c0_67] : memref<8x32xf32, #tpu.memory_space<vmem>>, vector<8x32xf32>
    %cst_68 = arith.constant dense<0.000000e+00> : vector<8x128xf32>
    %116 = tpu.matmul %115, %15, %cst_68 {dimension_numbers = #tpu.dot_dimension_numbers<[1], [0], [0], [1], [0, 0, 1, 1], [], []>} : vector<8x32xf32>, vector<32x128xf32>, vector<8x128xf32> -> vector<8x128xf32>
    %117 = arith.addf %114, %116 : vector<8x128xf32>
    %118 = arith.negf %117 : vector<8x128xf32>
    %119 = math.exp %118 : vector<8x128xf32>
    %cst_69 = arith.constant 1.000000e+00 : f32
    %120 = vector.broadcast %cst_69 : f32 to vector<8x128xf32>
    %121 = arith.addf %120, %119 : vector<8x128xf32>
    %122 = arith.divf %120, %121 : vector<8x128xf32>
    %123 = math.tanh %117 : vector<8x128xf32>
    %124 = vector.extract_strided_slice %122 {offsets = [0, 0], sizes = [8, 32], strides = [1, 1]} : vector<8x128xf32> to vector<8x32xf32>
    %125 = vector.extract_strided_slice %122 {offsets = [0, 32], sizes = [8, 32], strides = [1, 1]} : vector<8x128xf32> to vector<8x32xf32>
    %126 = vector.extract_strided_slice %123 {offsets = [0, 64], sizes = [8, 32], strides = [1, 1]} : vector<8x128xf32> to vector<8x32xf32>
    %127 = vector.extract_strided_slice %122 {offsets = [0, 96], sizes = [8, 32], strides = [1, 1]} : vector<8x128xf32> to vector<8x32xf32>
    %c0_70 = arith.constant 0 : index
    %c0_71 = arith.constant 0 : index
    %128 = vector.load %arg9[%c0_70, %c0_71] : memref<8x32xf32, #tpu.memory_space<vmem>>, vector<8x32xf32>
    %129 = arith.mulf %125, %128 : vector<8x32xf32>
    %130 = arith.mulf %124, %126 : vector<8x32xf32>
    %131 = arith.addf %129, %130 : vector<8x32xf32>
    %132 = math.tanh %131 : vector<8x32xf32>
    %133 = arith.mulf %127, %132 : vector<8x32xf32>
    %c0_72 = arith.constant 0 : index
    %c0_73 = arith.constant 0 : index
    %134 = vector.load %arg9[%c0_72, %c0_73] : memref<8x32xf32, #tpu.memory_space<vmem>>, vector<8x32xf32>
    tpu.vector_store %arg9[%c0_72, %c0_73], %131 {strides = array<i32>} : memref<8x32xf32, #tpu.memory_space<vmem>>, vector<8x32xf32>,
    %c0_74 = arith.constant 0 : index
    %c0_75 = arith.constant 0 : index
    %135 = vector.load %arg8[%c0_74, %c0_75] : memref<8x32xf32, #tpu.memory_space<vmem>>, vector<8x32xf32>
    tpu.vector_store %arg8[%c0_74, %c0_75], %133 {strides = array<i32>} : memref<8x32xf32, #tpu.memory_space<vmem>>, vector<8x32xf32>,
    %c5_i32 = arith.constant 5 : i32
    %136 = arith.index_cast %c5_i32 : i32 to index
    %c0_76 = arith.constant 0 : index
    %c0_77 = arith.constant 0 : index
    %137 = vector.load %arg7[%136, %c0_76, %c0_77] : memref<8x8x128xf32, #tpu.memory_space<vmem>>, vector<1x8x128xf32>
    %138 = vector.shape_cast %137 : vector<1x8x128xf32> to vector<8x128xf32>
    %c0_78 = arith.constant 0 : index
    %c0_79 = arith.constant 0 : index
    %139 = vector.load %arg8[%c0_78, %c0_79] : memref<8x32xf32, #tpu.memory_space<vmem>>, vector<8x32xf32>
    %cst_80 = arith.constant dense<0.000000e+00> : vector<8x128xf32>
    %140 = tpu.matmul %139, %15, %cst_80 {dimension_numbers = #tpu.dot_dimension_numbers<[1], [0], [0], [1], [0, 0, 1, 1], [], []>} : vector<8x32xf32>, vector<32x128xf32>, vector<8x128xf32> -> vector<8x128xf32>
    %141 = arith.addf %138, %140 : vector<8x128xf32>
    %142 = arith.negf %141 : vector<8x128xf32>
    %143 = math.exp %142 : vector<8x128xf32>
    %cst_81 = arith.constant 1.000000e+00 : f32
    %144 = vector.broadcast %cst_81 : f32 to vector<8x128xf32>
    %145 = arith.addf %144, %143 : vector<8x128xf32>
    %146 = arith.divf %144, %145 : vector<8x128xf32>
    %147 = math.tanh %141 : vector<8x128xf32>
    %148 = vector.extract_strided_slice %146 {offsets = [0, 0], sizes = [8, 32], strides = [1, 1]} : vector<8x128xf32> to vector<8x32xf32>
    %149 = vector.extract_strided_slice %146 {offsets = [0, 32], sizes = [8, 32], strides = [1, 1]} : vector<8x128xf32> to vector<8x32xf32>
    %150 = vector.extract_strided_slice %147 {offsets = [0, 64], sizes = [8, 32], strides = [1, 1]} : vector<8x128xf32> to vector<8x32xf32>
    %151 = vector.extract_strided_slice %146 {offsets = [0, 96], sizes = [8, 32], strides = [1, 1]} : vector<8x128xf32> to vector<8x32xf32>
    %c0_82 = arith.constant 0 : index
    %c0_83 = arith.constant 0 : index
    %152 = vector.load %arg9[%c0_82, %c0_83] : memref<8x32xf32, #tpu.memory_space<vmem>>, vector<8x32xf32>
    %153 = arith.mulf %149, %152 : vector<8x32xf32>
    %154 = arith.mulf %148, %150 : vector<8x32xf32>
    %155 = arith.addf %153, %154 : vector<8x32xf32>
    %156 = math.tanh %155 : vector<8x32xf32>
    %157 = arith.mulf %151, %156 : vector<8x32xf32>
    %c0_84 = arith.constant 0 : index
    %c0_85 = arith.constant 0 : index
    %158 = vector.load %arg9[%c0_84, %c0_85] : memref<8x32xf32, #tpu.memory_space<vmem>>, vector<8x32xf32>
    tpu.vector_store %arg9[%c0_84, %c0_85], %155 {strides = array<i32>} : memref<8x32xf32, #tpu.memory_space<vmem>>, vector<8x32xf32>,
    %c0_86 = arith.constant 0 : index
    %c0_87 = arith.constant 0 : index
    %159 = vector.load %arg8[%c0_86, %c0_87] : memref<8x32xf32, #tpu.memory_space<vmem>>, vector<8x32xf32>
    tpu.vector_store %arg8[%c0_86, %c0_87], %157 {strides = array<i32>} : memref<8x32xf32, #tpu.memory_space<vmem>>, vector<8x32xf32>,
    %c6_i32 = arith.constant 6 : i32
    %160 = arith.index_cast %c6_i32 : i32 to index
    %c0_88 = arith.constant 0 : index
    %c0_89 = arith.constant 0 : index
    %161 = vector.load %arg7[%160, %c0_88, %c0_89] : memref<8x8x128xf32, #tpu.memory_space<vmem>>, vector<1x8x128xf32>
    %162 = vector.shape_cast %161 : vector<1x8x128xf32> to vector<8x128xf32>
    %c0_90 = arith.constant 0 : index
    %c0_91 = arith.constant 0 : index
    %163 = vector.load %arg8[%c0_90, %c0_91] : memref<8x32xf32, #tpu.memory_space<vmem>>, vector<8x32xf32>
    %cst_92 = arith.constant dense<0.000000e+00> : vector<8x128xf32>
    %164 = tpu.matmul %163, %15, %cst_92 {dimension_numbers = #tpu.dot_dimension_numbers<[1], [0], [0], [1], [0, 0, 1, 1], [], []>} : vector<8x32xf32>, vector<32x128xf32>, vector<8x128xf32> -> vector<8x128xf32>
    %165 = arith.addf %162, %164 : vector<8x128xf32>
    %166 = arith.negf %165 : vector<8x128xf32>
    %167 = math.exp %166 : vector<8x128xf32>
    %cst_93 = arith.constant 1.000000e+00 : f32
    %168 = vector.broadcast %cst_93 : f32 to vector<8x128xf32>
    %169 = arith.addf %168, %167 : vector<8x128xf32>
    %170 = arith.divf %168, %169 : vector<8x128xf32>
    %171 = math.tanh %165 : vector<8x128xf32>
    %172 = vector.extract_strided_slice %170 {offsets = [0, 0], sizes = [8, 32], strides = [1, 1]} : vector<8x128xf32> to vector<8x32xf32>
    %173 = vector.extract_strided_slice %170 {offsets = [0, 32], sizes = [8, 32], strides = [1, 1]} : vector<8x128xf32> to vector<8x32xf32>
    %174 = vector.extract_strided_slice %171 {offsets = [0, 64], sizes = [8, 32], strides = [1, 1]} : vector<8x128xf32> to vector<8x32xf32>
    %175 = vector.extract_strided_slice %170 {offsets = [0, 96], sizes = [8, 32], strides = [1, 1]} : vector<8x128xf32> to vector<8x32xf32>
    %c0_94 = arith.constant 0 : index
    %c0_95 = arith.constant 0 : index
    %176 = vector.load %arg9[%c0_94, %c0_95] : memref<8x32xf32, #tpu.memory_space<vmem>>, vector<8x32xf32>
    %177 = arith.mulf %173, %176 : vector<8x32xf32>
    %178 = arith.mulf %172, %174 : vector<8x32xf32>
    %179 = arith.addf %177, %178 : vector<8x32xf32>
    %180 = math.tanh %179 : vector<8x32xf32>
    %181 = arith.mulf %175, %180 : vector<8x32xf32>
    %c0_96 = arith.constant 0 : index
    %c0_97 = arith.constant 0 : index
    %182 = vector.load %arg9[%c0_96, %c0_97] : memref<8x32xf32, #tpu.memory_space<vmem>>, vector<8x32xf32>
    tpu.vector_store %arg9[%c0_96, %c0_97], %179 {strides = array<i32>} : memref<8x32xf32, #tpu.memory_space<vmem>>, vector<8x32xf32>,
    %c0_98 = arith.constant 0 : index
    %c0_99 = arith.constant 0 : index
    %183 = vector.load %arg8[%c0_98, %c0_99] : memref<8x32xf32, #tpu.memory_space<vmem>>, vector<8x32xf32>
    tpu.vector_store %arg8[%c0_98, %c0_99], %181 {strides = array<i32>} : memref<8x32xf32, #tpu.memory_space<vmem>>, vector<8x32xf32>,
    %c7_i32 = arith.constant 7 : i32
    %184 = arith.index_cast %c7_i32 : i32 to index
    %c0_100 = arith.constant 0 : index
    %c0_101 = arith.constant 0 : index
    %185 = vector.load %arg7[%184, %c0_100, %c0_101] : memref<8x8x128xf32, #tpu.memory_space<vmem>>, vector<1x8x128xf32>
    %186 = vector.shape_cast %185 : vector<1x8x128xf32> to vector<8x128xf32>
    %c0_102 = arith.constant 0 : index
    %c0_103 = arith.constant 0 : index
    %187 = vector.load %arg8[%c0_102, %c0_103] : memref<8x32xf32, #tpu.memory_space<vmem>>, vector<8x32xf32>
    %cst_104 = arith.constant dense<0.000000e+00> : vector<8x128xf32>
    %188 = tpu.matmul %187, %15, %cst_104 {dimension_numbers = #tpu.dot_dimension_numbers<[1], [0], [0], [1], [0, 0, 1, 1], [], []>} : vector<8x32xf32>, vector<32x128xf32>, vector<8x128xf32> -> vector<8x128xf32>
    %189 = arith.addf %186, %188 : vector<8x128xf32>
    %190 = arith.negf %189 : vector<8x128xf32>
    %191 = math.exp %190 : vector<8x128xf32>
    %cst_105 = arith.constant 1.000000e+00 : f32
    %192 = vector.broadcast %cst_105 : f32 to vector<8x128xf32>
    %193 = arith.addf %192, %191 : vector<8x128xf32>
    %194 = arith.divf %192, %193 : vector<8x128xf32>
    %195 = math.tanh %189 : vector<8x128xf32>
    %196 = vector.extract_strided_slice %194 {offsets = [0, 0], sizes = [8, 32], strides = [1, 1]} : vector<8x128xf32> to vector<8x32xf32>
    %197 = vector.extract_strided_slice %194 {offsets = [0, 32], sizes = [8, 32], strides = [1, 1]} : vector<8x128xf32> to vector<8x32xf32>
    %198 = vector.extract_strided_slice %195 {offsets = [0, 64], sizes = [8, 32], strides = [1, 1]} : vector<8x128xf32> to vector<8x32xf32>
    %199 = vector.extract_strided_slice %194 {offsets = [0, 96], sizes = [8, 32], strides = [1, 1]} : vector<8x128xf32> to vector<8x32xf32>
    %c0_106 = arith.constant 0 : index
    %c0_107 = arith.constant 0 : index
    %200 = vector.load %arg9[%c0_106, %c0_107] : memref<8x32xf32, #tpu.memory_space<vmem>>, vector<8x32xf32>
    %201 = arith.mulf %197, %200 : vector<8x32xf32>
    %202 = arith.mulf %196, %198 : vector<8x32xf32>
    %203 = arith.addf %201, %202 : vector<8x32xf32>
    %204 = math.tanh %203 : vector<8x32xf32>
    %205 = arith.mulf %199, %204 : vector<8x32xf32>
    %c0_108 = arith.constant 0 : index
    %c0_109 = arith.constant 0 : index
    %206 = vector.load %arg9[%c0_108, %c0_109] : memref<8x32xf32, #tpu.memory_space<vmem>>, vector<8x32xf32>
    tpu.vector_store %arg9[%c0_108, %c0_109], %203 {strides = array<i32>} : memref<8x32xf32, #tpu.memory_space<vmem>>, vector<8x32xf32>,
    %c0_110 = arith.constant 0 : index
    %c0_111 = arith.constant 0 : index
    %207 = vector.load %arg8[%c0_110, %c0_111] : memref<8x32xf32, #tpu.memory_space<vmem>>, vector<8x32xf32>
    tpu.vector_store %arg8[%c0_110, %c0_111], %205 {strides = array<i32>} : memref<8x32xf32, #tpu.memory_space<vmem>>, vector<8x32xf32>,
    %c8_i32 = arith.constant 8 : i32
    %c0_112 = arith.constant 0 : index
    %c0_113 = arith.constant 0 : index
    %208 = vector.load %arg8[%c0_112, %c0_113] : memref<8x32xf32, #tpu.memory_space<vmem>>, vector<8x32xf32>
    %c0_114 = arith.constant 0 : index
    %c0_115 = arith.constant 0 : index
    %209 = vector.load %arg4[%c0_114, %c0_115] : memref<32x128xf32, #tpu.memory_space<vmem>>, vector<32x128xf32>
    %cst_116 = arith.constant dense<0.000000e+00> : vector<8x128xf32>
    %210 = tpu.matmul %208, %209, %cst_116 {dimension_numbers = #tpu.dot_dimension_numbers<[1], [0], [0], [1], [0, 0, 1, 1], [], []>} : vector<8x32xf32>, vector<32x128xf32>, vector<8x128xf32> -> vector<8x128xf32>
    %c0_117 = arith.constant 0 : index
    %c0_118 = arith.constant 0 : index
    %211 = vector.load %arg5[%c0_117, %c0_118] : memref<1x128xf32, #tpu.memory_space<vmem>>, vector<1x128xf32>
    %212 = vector.broadcast %211 : vector<1x128xf32> to vector<8x128xf32>
    %213 = arith.addf %210, %212 : vector<8x128xf32>
    %c0_119 = arith.constant 0 : index
    %c0_120 = arith.constant 0 : index
    %214 = vector.load %arg6[%c0_119, %c0_120] : memref<8x128xf32, #tpu.memory_space<vmem>>, vector<8x128xf32>
    tpu.vector_store %arg6[%c0_119, %c0_120], %213 {strides = array<i32>} : memref<8x128xf32, #tpu.memory_space<vmem>>, vector<8x128xf32>,
    return
  }
}

</mosaic_0001>

<llo_original>
// kernel: tpu_custom_call.1
$region0: #{tpu_custom_call.1}
  #allocation0 [shape = 'u32[]', space=smem, size = 0x4, offset = 0x4, fixed_abs, tag = 'smem constant byte address 0x4 - core index']
  #allocation1 [shape = 'u32[144,128]{1,0:T(1,128)}', space=vmem, size = 0x12000, scoped, tag = 'internal scratch']
  #allocation2 [shape = 'f32[8,8,128]{2,1,0:T(8,128)}', space=vmem, size = 0x8000, scoped, tag = 'scratch operand']
  #allocation3 [shape = 'f32[8,32]{1,0:T(8,128)}', space=vmem, size = 0x1000, scoped, tag = 'scratch operand']
  #allocation4 [shape = 'f32[8,32]{1,0:T(8,128)}', space=vmem, size = 0x1000, scoped, tag = 'scratch operand']
  %s0 = inlined_call_operand.vmem [shape: f32[8,8,1], index: 0, kind: input, shape index: {}]
  %s1 = inlined_call_operand.vmem [shape: f32[1,128], index: 1, kind: input, shape index: {}]
  %s2 = inlined_call_operand.vmem [shape: f32[32,128], index: 2, kind: input, shape index: {}]
  %s3 = inlined_call_operand.vmem [shape: f32[1,128], index: 3, kind: input, shape index: {}]
  %s4 = inlined_call_operand.vmem [shape: f32[32,128], index: 4, kind: input, shape index: {}]
  %s5 = inlined_call_operand.vmem [shape: f32[1,128], index: 5, kind: input, shape index: {}]
  %s6 = inlined_call_operand.hbm [shape: f32[8,128], index: 6, kind: output, shape index: {}]
  %s7 = sld [smem:[#allocation0]]
  $region34: #{tpu_custom_call.1} parent=0
    _
  %s9 = ssub.s32 1, %s7
  %s10 = scalar_select 0, %s9, %s7
  $region1: #{tpu_custom_call.1} parent=0
    #allocation5 [shape = 'u8[4096]{0}', space=vmem, size = 0x1000, scoped, tag = 'output window, operand 0, single buffered']
    #allocation6 [shape = 's32[1]{0}', space=sflag, size = 0x4, scoped, tag = 'scoped memory for tpu_custom_call.1']
    %11 = vsyncpa [#allocation6], 0
    // Predicated region
    $region2: #{tpu_custom_call.1} parent=1 // pred_check
      _
    $region3: #{tpu_custom_call.1} parent=1 // pred_check_branch
      %13 = sbr.rel (0) target = $region5
    $region4: #{tpu_custom_call.1} parent=1 // pred_region
      _
    $region5: #{tpu_custom_call.1} parent=1 // pred_fallthru
      _
    // Predicated region
    $region6: #{tpu_custom_call.1} parent=1 // pred_check
      _
    $region7: #{tpu_custom_call.1} parent=1 // pred_check_branch
      %15 = sbr.rel (0) target = $region9
    $region8: #{tpu_custom_call.1} parent=1 // pred_region
      _
    $region9: #{tpu_custom_call.1} parent=1 // pred_fallthru
      _
    // Predicated region
    $region10: #{tpu_custom_call.1} parent=1 // pred_check
      _
    $region11: #{tpu_custom_call.1} parent=1 // pred_check_branch
      %17 = sbr.rel (0) target = $region13
    $region12: #{tpu_custom_call.1} parent=1 // pred_region
      _
    $region13: #{tpu_custom_call.1} parent=1 // pred_fallthru
      _
    // Predicated region
    $region14: #{tpu_custom_call.1} parent=1 // pred_check
      _
    $region15: #{tpu_custom_call.1} parent=1 // pred_check_branch
      %19 = sbr.rel (0) target = $region17
    $region16: #{tpu_custom_call.1} parent=1 // pred_region
      _
    $region17: #{tpu_custom_call.1} parent=1 // pred_fallthru
      _
    // Predicated region
    $region18: #{tpu_custom_call.1} parent=1 // pred_check
      _
    $region19: #{tpu_custom_call.1} parent=1 // pred_check_branch
      %21 = sbr.rel (0) target = $region21
    $region20: #{tpu_custom_call.1} parent=1 // pred_region
      _
    $region21: #{tpu_custom_call.1} parent=1 // pred_fallthru
      _
    // Predicated region
    $region22: #{tpu_custom_call.1} parent=1 // pred_check
      _
    $region23: #{tpu_custom_call.1} parent=1 // pred_check_branch
      %23 = sbr.rel (0) target = $region25
    $region24: #{tpu_custom_call.1} parent=1 // pred_region
      _
    $region25: #{tpu_custom_call.1} parent=1 // pred_fallthru
      _
    %v24 = vld [vmem:[%s0] sm:$0xff]
    %v25 = vld [vmem:[%s0 + $0x8] sm:$0xff]
    %v26 = vld [vmem:[%s0 + $0x10] sm:$0xff]
    %v27 = vld [vmem:[%s0 + $0x18] sm:$0xff]
    %v28 = vld [vmem:[%s0 + $0x20] sm:$0xff]
    %v29 = vld [vmem:[%s0 + $0x28] sm:$0xff]
    %v30 = vld [vmem:[%s0 + $0x30] sm:$0xff]
    %v31 = vld [vmem:[%s0 + $0x38] sm:$0xff]
    %v32 = vld [vmem:[%s1] sm:$0x1]
    %34 = vset.pattern.permute.xlu0 0
    %35 = vperm.xlu0 %34, %v24
    %v36 = vpop.permute.xlu0 %35
    %39 = vset.pattern.permute.xlu0 0
    %40 = vperm.xlu0 %39, %v25
    %v41 = vpop.permute.xlu0 %40
    %44 = vset.pattern.permute.xlu0 0
    %45 = vperm.xlu0 %44, %v26
    %v46 = vpop.permute.xlu0 %45
    %49 = vset.pattern.permute.xlu0 0
    %50 = vperm.xlu0 %49, %v27
    %v51 = vpop.permute.xlu0 %50
    %54 = vset.pattern.permute.xlu0 0
    %55 = vperm.xlu0 %54, %v28
    %v56 = vpop.permute.xlu0 %55
    %59 = vset.pattern.permute.xlu0 0
    %60 = vperm.xlu0 %59, %v29
    %v61 = vpop.permute.xlu0 %60
    %64 = vset.pattern.permute.xlu0 0
    %65 = vperm.xlu0 %64, %v30
    %v66 = vpop.permute.xlu0 %65
    %69 = vset.pattern.permute.xlu0 0
    %70 = vperm.xlu0 %69, %v31
    %v71 = vpop.permute.xlu0 %70
    %v74 = vlaneseq
    %v75 = vshrl.u32 %v74, 7
    %v76 = vsub.s32 0, %v75
    %v77 = vrot.slane %v32, %v76
    %v79 = vmul.f32 %v36, %v77
    %v80 = vmul.f32 %v41, %v77
    %v81 = vmul.f32 %v46, %v77
    %v82 = vmul.f32 %v51, %v77
    %v83 = vmul.f32 %v56, %v77
    %v84 = vmul.f32 %v61, %v77
    %v85 = vmul.f32 %v66, %v77
    %v86 = vmul.f32 %v71, %v77
    %v87 = vld [vmem:[%s3] sm:$0x1]
    %v89 = vlaneseq
    %v90 = vshrl.u32 %v89, 7
    %v91 = vsub.s32 0, %v90
    %v92 = vrot.slane %v87, %v91
    %v94 = vadd.f32 %v79, %v92
    %v95 = vadd.f32 %v80, %v92
    %v96 = vadd.f32 %v81, %v92
    %v97 = vadd.f32 %v82, %v92
    %v98 = vadd.f32 %v83, %v92
    %v99 = vadd.f32 %v84, %v92
    %v100 = vadd.f32 %v85, %v92
    %v101 = vadd.f32 %v86, %v92
    %102 = vst [vmem:[#allocation2] sm:$0xff] %v94
    %103 = vst [vmem:[#allocation2 + $0x8] sm:$0xff] %v95
    %104 = vst [vmem:[#allocation2 + $0x10] sm:$0xff] %v96
    %105 = vst [vmem:[#allocation2 + $0x18] sm:$0xff] %v97
    %106 = vst [vmem:[#allocation2 + $0x20] sm:$0xff] %v98
    %107 = vst [vmem:[#allocation2 + $0x28] sm:$0xff] %v99
    %108 = vst [vmem:[#allocation2 + $0x30] sm:$0xff] %v100
    %109 = vst [vmem:[#allocation2 + $0x38] sm:$0xff] %v101
    %vm110 = vcmask 261120
    %111 = vst.msk [vmem:[#allocation3] sm:$0xff] %vm110, 0.0
    %112 = vst.msk [vmem:[#allocation4] sm:$0xff] %vm110, 0.0
    %v113 = vld [vmem:[%s2] sm:$0xff]
    %v114 = vld [vmem:[%s2 + $0x8] sm:$0xff]
    %v115 = vld [vmem:[%s2 + $0x10] sm:$0xff]
    %v116 = vld [vmem:[%s2 + $0x18] sm:$0xff]
    %v117 = vld [vmem:[#allocation2] sm:$0xff]
    %v118 = vld [vmem:[#allocation3] sm:$0xff]
    %v120 = vsel %vm110, %v118, 0
    %122 = vmatprep.subr.mxu0 0.0
    %123 = vmatpush1.msra.mxu0 %v113
    %124 = vmatprep.subr.mxu0 0.0
    %125 = vmatpush1.msra.mxu0 %v114
    %126 = vmatprep.subr.mxu0 0.0
    %127 = vmatpush1.msra.mxu0 %v115
    %128 = vmatprep.subr.mxu0 0.0
    %129 = vmatpush1.msra.mxu0 %v116
    %130 = vmatprep.subr.mxu0 0.0
    %131 = vmatpush1.msra.mxu0 0.0
    %132 = vmatprep.subr.mxu0 0.0
    %133 = vmatpush1.msra.mxu0 0.0
    %134 = vmatprep.subr.mxu0 0.0
    %135 = vmatpush1.msra.mxu0 0.0
    %136 = vmatprep.subr.mxu0 0.0
    %137 = vmatpush1.msra.mxu0 0.0
    %138 = vmatprep.subr.mxu0 0.0
    %139 = vmatpush1.msra.mxu0 0.0
    %140 = vmatprep.subr.mxu0 0.0
    %141 = vmatpush1.msra.mxu0 0.0
    %142 = vmatprep.subr.mxu0 0.0
    %143 = vmatpush1.msra.mxu0 0.0
    %144 = vmatprep.subr.mxu0 0.0
    %145 = vmatpush1.msra.mxu0 0.0
    %146 = vmatprep.subr.mxu0 0.0
    %147 = vmatpush1.msra.mxu0 0.0
    %148 = vmatprep.subr.mxu0 0.0
    %149 = vmatpush1.msra.mxu0 0.0
    %150 = vmatprep.subr.mxu0 0.0
    %151 = vmatpush1.msra.mxu0 0.0
    %152 = vmatprep.subr.mxu0 0.0
    %153 = vmatpush1.msra.mxu0 0.0
    %154 = vmatprep.subr.mxu0 0.0
    %155 = vmatpush1.msra.mxu0 0.0
    %156 = vmatprep.subr.mxu0 0.0
    %157 = vmatpush1.msra.mxu0 0.0
    %158 = vmatprep.subr.mxu0 0.0
    %159 = vmatpush1.msra.mxu0 0.0
    %160 = vmatprep.subr.mxu0 0.0
    %161 = vmatpush1.msra.mxu0 0.0
    %162 = vmatprep.subr.mxu0 0.0
    %163 = vmatpush1.msra.mxu0 0.0
    %164 = vmatprep.subr.mxu0 0.0
    %165 = vmatpush1.msra.mxu0 0.0
    %166 = vmatprep.subr.mxu0 0.0
    %167 = vmatpush1.msra.mxu0 0.0
    %168 = vmatprep.subr.mxu0 0.0
    %169 = vmatpush1.msra.mxu0 0.0
    %170 = vmatprep.subr.mxu0 0.0
    %171 = vmatpush1.msra.mxu0 0.0
    %172 = vmatprep.subr.mxu0 0.0
    %173 = vmatpush1.msra.mxu0 0.0
    %174 = vmatprep.subr.mxu0 0.0
    %175 = vmatpush1.msra.mxu0 0.0
    %176 = vmatprep.subr.mxu0 0.0
    %177 = vmatpush1.msra.mxu0 0.0
    %178 = vmatprep.subr.mxu0 0.0
    %179 = vmatpush1.msra.mxu0 0.0
    %180 = vmatprep.subr.mxu0 0.0
    %181 = vmatpush1.msra.mxu0 0.0
    %182 = vmatprep.subr.mxu0 0.0
    %183 = vmatpush1.msra.mxu0 0.0
    %184 = vmatprep.subr.mxu0 0.0
    %185 = vmatpush1.msra.mxu0 0.0
    %186 = vmatprep.mubr.f32.mxu0 0.0
    %187 = vmatmul.mubr.f32.gmra.mrb[0].mxu0 %v120
    %v188 = vpop.f32.mrb[0].mxu0
    %v189 = vadd.f32 0.0, %v188
    %v190 = vpop.f32.mrb[0].mxu0
    %191 = vdwg.mxu0
    %v192 = vadd.f32 %v117, %v189
    %v193 = vxor.u32 %v192, 2147483648
    %v194 = vmul.f32 %v193, 1.442695
    %v195 = vpow.pop %v194
    %v196 = vadd.f32 %v195, 1.0
    %v197 = vrcp.pop %v196
    %v198 = vmul.f32 1.0, %v197
    %v199 = vtanh.pop %v192
    %v200 = vld [vmem:[#allocation4] sm:$0xff]
    %202 = vrot.lane.b32.xlu0 %v200, 32
    %v203 = vpop.permute.xlu0 %202
    %v205 = vmul.f32 %v198, %v203
    %207 = vrot.lane.b32.xlu0 %v199, 64
    %v208 = vpop.permute.xlu0 %207
    %v210 = vmul.f32 %v198, %v208
    %212 = vrot.lane.b32.xlu0 %v210, 32
    %v213 = vpop.permute.xlu0 %212
    %v215 = vadd.f32 %v205, %v213
    %v216 = vtanh.pop %v215
    %218 = vrot.lane.b32.xlu0 %v216, 64
    %v219 = vpop.permute.xlu0 %218
    %v221 = vmul.f32 %v198, %v219
    %223 = vrot.lane.b32.xlu0 %v215, 96
    %v224 = vpop.permute.xlu0 %223
    %226 = vst.msk [vmem:[#allocation4] sm:$0xff] %vm110, %v224
    %228 = vrot.lane.b32.xlu0 %v221, 32
    %v229 = vpop.permute.xlu0 %228
    %231 = vst.msk [vmem:[#allocation3] sm:$0xff] %vm110, %v229
    %s232 = scalar_lea.vmem [#allocation2], 8
    %v233 = vld [vmem:[%s232] sm:$0xff]
    %v234 = vld [vmem:[#allocation3] sm:$0xff]
    %v236 = vsel %vm110, %v234, 0
    %238 = vmatprep.subr.mxu0 0.0
    %239 = vmatpush1.msra.mxu0 %v113
    %240 = vmatprep.subr.mxu0 0.0
    %241 = vmatpush1.msra.mxu0 %v114
    %242 = vmatprep.subr.mxu0 0.0
    %243 = vmatpush1.msra.mxu0 %v115
    %244 = vmatprep.subr.mxu0 0.0
    %245 = vmatpush1.msra.mxu0 %v116
    %246 = vmatprep.subr.mxu0 0.0
    %247 = vmatpush1.msra.mxu0 0.0
    %248 = vmatprep.subr.mxu0 0.0
    %249 = vmatpush1.msra.mxu0 0.0
    %250 = vmatprep.subr.mxu0 0.0
    %251 = vmatpush1.msra.mxu0 0.0
    %252 = vmatprep.subr.mxu0 0.0
    %253 = vmatpush1.msra.mxu0 0.0
    %254 = vmatprep.subr.mxu0 0.0
    %255 = vmatpush1.msra.mxu0 0.0
    %256 = vmatprep.subr.mxu0 0.0
    %257 = vmatpush1.msra.mxu0 0.0
    %258 = vmatprep.subr.mxu0 0.0
    %259 = vmatpush1.msra.mxu0 0.0
    %260 = vmatprep.subr.mxu0 0.0
    %261 = vmatpush1.msra.mxu0 0.0
    %262 = vmatprep.subr.mxu0 0.0
    %263 = vmatpush1.msra.mxu0 0.0
    %264 = vmatprep.subr.mxu0 0.0
    %265 = vmatpush1.msra.mxu0 0.0
    %266 = vmatprep.subr.mxu0 0.0
    %267 = vmatpush1.msra.mxu0 0.0
    %268 = vmatprep.subr.mxu0 0.0
    %269 = vmatpush1.msra.mxu0 0.0
    %270 = vmatprep.subr.mxu0 0.0
    %271 = vmatpush1.msra.mxu0 0.0
    %272 = vmatprep.subr.mxu0 0.0
    %273 = vmatpush1.msra.mxu0 0.0
    %274 = vmatprep.subr.mxu0 0.0
    %275 = vmatpush1.msra.mxu0 0.0
    %276 = vmatprep.subr.mxu0 0.0
    %277 = vmatpush1.msra.mxu0 0.0
    %278 = vmatprep.subr.mxu0 0.0
    %279 = vmatpush1.msra.mxu0 0.0
    %280 = vmatprep.subr.mxu0 0.0
    %281 = vmatpush1.msra.mxu0 0.0
    %282 = vmatprep.subr.mxu0 0.0
    %283 = vmatpush1.msra.mxu0 0.0
    %284 = vmatprep.subr.mxu0 0.0
    %285 = vmatpush1.msra.mxu0 0.0
    %286 = vmatprep.subr.mxu0 0.0
    %287 = vmatpush1.msra.mxu0 0.0
    %288 = vmatprep.subr.mxu0 0.0
    %289 = vmatpush1.msra.mxu0 0.0
    %290 = vmatprep.subr.mxu0 0.0
    %291 = vmatpush1.msra.mxu0 0.0
    %292 = vmatprep.subr.mxu0 0.0
    %293 = vmatpush1.msra.mxu0 0.0
    %294 = vmatprep.subr.mxu0 0.0
    %295 = vmatpush1.msra.mxu0 0.0
    %296 = vmatprep.subr.mxu0 0.0
    %297 = vmatpush1.msra.mxu0 0.0
    %298 = vmatprep.subr.mxu0 0.0
    %299 = vmatpush1.msra.mxu0 0.0
    %300 = vmatprep.subr.mxu0 0.0
    %301 = vmatpush1.msra.mxu0 0.0
    %302 = vmatprep.mubr.f32.mxu0 0.0
    %303 = vmatmul.mubr.f32.gmra.mrb[0].mxu0 %v236
    %v304 = vpop.f32.mrb[0].mxu0
    %v305 = vadd.f32 0.0, %v304
    %v306 = vpop.f32.mrb[0].mxu0
    %307 = vdwg.mxu0
    %v308 = vadd.f32 %v233, %v305
    %v309 = vxor.u32 %v308, 2147483648
    %v310 = vmul.f32 %v309, 1.442695
    %v311 = vpow.pop %v310
    %v312 = vadd.f32 %v311, 1.0
    %v313 = vrcp.pop %v312
    %v314 = vmul.f32 1.0, %v313
    %v315 = vtanh.pop %v308
    %v316 = vld [vmem:[#allocation4] sm:$0xff]
    %318 = vrot.lane.b32.xlu0 %v316, 32
    %v319 = vpop.permute.xlu0 %318
    %v321 = vmul.f32 %v314, %v319
    %323 = vrot.lane.b32.xlu0 %v315, 64
    %v324 = vpop.permute.xlu0 %323
    %v326 = vmul.f32 %v314, %v324
    %328 = vrot.lane.b32.xlu0 %v326, 32
    %v329 = vpop.permute.xlu0 %328
    %v331 = vadd.f32 %v321, %v329
    %v332 = vtanh.pop %v331
    %334 = vrot.lane.b32.xlu0 %v332, 64
    %v335 = vpop.permute.xlu0 %334
    %v337 = vmul.f32 %v314, %v335
    %339 = vrot.lane.b32.xlu0 %v331, 96
    %v340 = vpop.permute.xlu0 %339
    %342 = vst.msk [vmem:[#allocation4] sm:$0xff] %vm110, %v340
    %344 = vrot.lane.b32.xlu0 %v337, 32
    %v345 = vpop.permute.xlu0 %344
    %347 = vst.msk [vmem:[#allocation3] sm:$0xff] %vm110, %v345
    %s348 = scalar_lea.vmem [#allocation2], 16
    %v349 = vld [vmem:[%s348] sm:$0xff]
    %v350 = vld [vmem:[#allocation3] sm:$0xff]
    %v352 = vsel %vm110, %v350, 0
    %354 = vmatprep.subr.mxu0 0.0
    %355 = vmatpush1.msra.mxu0 %v113
    %356 = vmatprep.subr.mxu0 0.0
    %357 = vmatpush1.msra.mxu0 %v114
    %358 = vmatprep.subr.mxu0 0.0
    %359 = vmatpush1.msra.mxu0 %v115
    %360 = vmatprep.subr.mxu0 0.0
    %361 = vmatpush1.msra.mxu0 %v116
    %362 = vmatprep.subr.mxu0 0.0
    %363 = vmatpush1.msra.mxu0 0.0
    %364 = vmatprep.subr.mxu0 0.0
    %365 = vmatpush1.msra.mxu0 0.0
    %366 = vmatprep.subr.mxu0 0.0
    %367 = vmatpush1.msra.mxu0 0.0
    %368 = vmatprep.subr.mxu0 0.0
    %369 = vmatpush1.msra.mxu0 0.0
    %370 = vmatprep.subr.mxu0 0.0
    %371 = vmatpush1.msra.mxu0 0.0
    %372 = vmatprep.subr.mxu0 0.0
    %373 = vmatpush1.msra.mxu0 0.0
    %374 = vmatprep.subr.mxu0 0.0
    %375 = vmatpush1.msra.mxu0 0.0
    %376 = vmatprep.subr.mxu0 0.0
    %377 = vmatpush1.msra.mxu0 0.0
    %378 = vmatprep.subr.mxu0 0.0
    %379 = vmatpush1.msra.mxu0 0.0
    %380 = vmatprep.subr.mxu0 0.0
    %381 = vmatpush1.msra.mxu0 0.0
    %382 = vmatprep.subr.mxu0 0.0
    %383 = vmatpush1.msra.mxu0 0.0
    %384 = vmatprep.subr.mxu0 0.0
    %385 = vmatpush1.msra.mxu0 0.0
    %386 = vmatprep.subr.mxu0 0.0
    %387 = vmatpush1.msra.mxu0 0.0
    %388 = vmatprep.subr.mxu0 0.0
    %389 = vmatpush1.msra.mxu0 0.0
    %390 = vmatprep.subr.mxu0 0.0
    %391 = vmatpush1.msra.mxu0 0.0
    %392 = vmatprep.subr.mxu0 0.0
    %393 = vmatpush1.msra.mxu0 0.0
    %394 = vmatprep.subr.mxu0 0.0
    %395 = vmatpush1.msra.mxu0 0.0
    %396 = vmatprep.subr.mxu0 0.0
    %397 = vmatpush1.msra.mxu0 0.0
    %398 = vmatprep.subr.mxu0 0.0
    %399 = vmatpush1.msra.mxu0 0.0
    %400 = vmatprep.subr.mxu0 0.0
    %401 = vmatpush1.msra.mxu0 0.0
    %402 = vmatprep.subr.mxu0 0.0
    %403 = vmatpush1.msra.mxu0 0.0
    %404 = vmatprep.subr.mxu0 0.0
    %405 = vmatpush1.msra.mxu0 0.0
    %406 = vmatprep.subr.mxu0 0.0
    %407 = vmatpush1.msra.mxu0 0.0
    %408 = vmatprep.subr.mxu0 0.0
    %409 = vmatpush1.msra.mxu0 0.0
    %410 = vmatprep.subr.mxu0 0.0
    %411 = vmatpush1.msra.mxu0 0.0
    %412 = vmatprep.subr.mxu0 0.0
    %413 = vmatpush1.msra.mxu0 0.0
    %414 = vmatprep.subr.mxu0 0.0
    %415 = vmatpush1.msra.mxu0 0.0
    %416 = vmatprep.subr.mxu0 0.0
    %417 = vmatpush1.msra.mxu0 0.0
    %418 = vmatprep.mubr.f32.mxu0 0.0
    %419 = vmatmul.mubr.f32.gmra.mrb[0].mxu0 %v352
    %v420 = vpop.f32.mrb[0].mxu0
    %v421 = vadd.f32 0.0, %v420
    %v422 = vpop.f32.mrb[0].mxu0
    %423 = vdwg.mxu0
    %v424 = vadd.f32 %v349, %v421
    %v425 = vxor.u32 %v424, 2147483648
    %v426 = vmul.f32 %v425, 1.442695
    %v427 = vpow.pop %v426
    %v428 = vadd.f32 %v427, 1.0
    %v429 = vrcp.pop %v428
    %v430 = vmul.f32 1.0, %v429
    %v431 = vtanh.pop %v424
    %v432 = vld [vmem:[#allocation4] sm:$0xff]
    %434 = vrot.lane.b32.xlu0 %v432, 32
    %v435 = vpop.permute.xlu0 %434
    %v437 = vmul.f32 %v430, %v435
    %439 = vrot.lane.b32.xlu0 %v431, 64
    %v440 = vpop.permute.xlu0 %439
    %v442 = vmul.f32 %v430, %v440
    %444 = vrot.lane.b32.xlu0 %v442, 32
    %v445 = vpop.permute.xlu0 %444
    %v447 = vadd.f32 %v437, %v445
    %v448 = vtanh.pop %v447
    %450 = vrot.lane.b32.xlu0 %v448, 64
    %v451 = vpop.permute.xlu0 %450
    %v453 = vmul.f32 %v430, %v451
    %455 = vrot.lane.b32.xlu0 %v447, 96
    %v456 = vpop.permute.xlu0 %455
    %458 = vst.msk [vmem:[#allocation4] sm:$0xff] %vm110, %v456
    %460 = vrot.lane.b32.xlu0 %v453, 32
    %v461 = vpop.permute.xlu0 %460
    %463 = vst.msk [vmem:[#allocation3] sm:$0xff] %vm110, %v461
    %s464 = scalar_lea.vmem [#allocation2], 24
    %v465 = vld [vmem:[%s464] sm:$0xff]
    %v466 = vld [vmem:[#allocation3] sm:$0xff]
    %v468 = vsel %vm110, %v466, 0
    %470 = vmatprep.subr.mxu0 0.0
    %471 = vmatpush1.msra.mxu0 %v113
    %472 = vmatprep.subr.mxu0 0.0
    %473 = vmatpush1.msra.mxu0 %v114
    %474 = vmatprep.subr.mxu0 0.0
    %475 = vmatpush1.msra.mxu0 %v115
    %476 = vmatprep.subr.mxu0 0.0
    %477 = vmatpush1.msra.mxu0 %v116
    %478 = vmatprep.subr.mxu0 0.0
    %479 = vmatpush1.msra.mxu0 0.0
    %480 = vmatprep.subr.mxu0 0.0
    %481 = vmatpush1.msra.mxu0 0.0
    %482 = vmatprep.subr.mxu0 0.0
    %483 = vmatpush1.msra.mxu0 0.0
    %484 = vmatprep.subr.mxu0 0.0
    %485 = vmatpush1.msra.mxu0 0.0
    %486 = vmatprep.subr.mxu0 0.0
    %487 = vmatpush1.msra.mxu0 0.0
    %488 = vmatprep.subr.mxu0 0.0
    %489 = vmatpush1.msra.mxu0 0.0
    %490 = vmatprep.subr.mxu0 0.0
    %491 = vmatpush1.msra.mxu0 0.0
    %492 = vmatprep.subr.mxu0 0.0
    %493 = vmatpush1.msra.mxu0 0.0
    %494 = vmatprep.subr.mxu0 0.0
    %495 = vmatpush1.msra.mxu0 0.0
    %496 = vmatprep.subr.mxu0 0.0
    %497 = vmatpush1.msra.mxu0 0.0
    %498 = vmatprep.subr.mxu0 0.0
    %499 = vmatpush1.msra.mxu0 0.0
    %500 = vmatprep.subr.mxu0 0.0
    %501 = vmatpush1.msra.mxu0 0.0
    %502 = vmatprep.subr.mxu0 0.0
    %503 = vmatpush1.msra.mxu0 0.0
    %504 = vmatprep.subr.mxu0 0.0
    %505 = vmatpush1.msra.mxu0 0.0
    %506 = vmatprep.subr.mxu0 0.0
    %507 = vmatpush1.msra.mxu0 0.0
    %508 = vmatprep.subr.mxu0 0.0
    %509 = vmatpush1.msra.mxu0 0.0
    %510 = vmatprep.subr.mxu0 0.0
    %511 = vmatpush1.msra.mxu0 0.0
    %512 = vmatprep.subr.mxu0 0.0
    %513 = vmatpush1.msra.mxu0 0.0
    %514 = vmatprep.subr.mxu0 0.0
    %515 = vmatpush1.msra.mxu0 0.0
    %516 = vmatprep.subr.mxu0 0.0
    %517 = vmatpush1.msra.mxu0 0.0
    %518 = vmatprep.subr.mxu0 0.0
    %519 = vmatpush1.msra.mxu0 0.0
    %520 = vmatprep.subr.mxu0 0.0
    %521 = vmatpush1.msra.mxu0 0.0
    %522 = vmatprep.subr.mxu0 0.0
    %523 = vmatpush1.msra.mxu0 0.0
    %524 = vmatprep.subr.mxu0 0.0
    %525 = vmatpush1.msra.mxu0 0.0
    %526 = vmatprep.subr.mxu0 0.0
    %527 = vmatpush1.msra.mxu0 0.0
    %528 = vmatprep.subr.mxu0 0.0
    %529 = vmatpush1.msra.mxu0 0.0
    %530 = vmatprep.subr.mxu0 0.0
    %531 = vmatpush1.msra.mxu0 0.0
    %532 = vmatprep.subr.mxu0 0.0
    %533 = vmatpush1.msra.mxu0 0.0
    %534 = vmatprep.mubr.f32.mxu0 0.0
    %535 = vmatmul.mubr.f32.gmra.mrb[0].mxu0 %v468
    %v536 = vpop.f32.mrb[0].mxu0
    %v537 = vadd.f32 0.0, %v536
    %v538 = vpop.f32.mrb[0].mxu0
    %539 = vdwg.mxu0
    %v540 = vadd.f32 %v465, %v537
    %v541 = vxor.u32 %v540, 2147483648
    %v542 = vmul.f32 %v541, 1.442695
    %v543 = vpow.pop %v542
    %v544 = vadd.f32 %v543, 1.0
    %v545 = vrcp.pop %v544
    %v546 = vmul.f32 1.0, %v545
    %v547 = vtanh.pop %v540
    %v548 = vld [vmem:[#allocation4] sm:$0xff]
    %550 = vrot.lane.b32.xlu0 %v548, 32
    %v551 = vpop.permute.xlu0 %550
    %v553 = vmul.f32 %v546, %v551
    %555 = vrot.lane.b32.xlu0 %v547, 64
    %v556 = vpop.permute.xlu0 %555
    %v558 = vmul.f32 %v546, %v556
    %560 = vrot.lane.b32.xlu0 %v558, 32
    %v561 = vpop.permute.xlu0 %560
    %v563 = vadd.f32 %v553, %v561
    %v564 = vtanh.pop %v563
    %566 = vrot.lane.b32.xlu0 %v564, 64
    %v567 = vpop.permute.xlu0 %566
    %v569 = vmul.f32 %v546, %v567
    %571 = vrot.lane.b32.xlu0 %v563, 96
    %v572 = vpop.permute.xlu0 %571
    %574 = vst.msk [vmem:[#allocation4] sm:$0xff] %vm110, %v572
    %576 = vrot.lane.b32.xlu0 %v569, 32
    %v577 = vpop.permute.xlu0 %576
    %579 = vst.msk [vmem:[#allocation3] sm:$0xff] %vm110, %v577
    %s580 = scalar_lea.vmem [#allocation2], 32
    %v581 = vld [vmem:[%s580] sm:$0xff]
    %v582 = vld [vmem:[#allocation3] sm:$0xff]
    %v584 = vsel %vm110, %v582, 0
    %586 = vmatprep.subr.mxu0 0.0
    %587 = vmatpush1.msra.mxu0 %v113
    %588 = vmatprep.subr.mxu0 0.0
    %589 = vmatpush1.msra.mxu0 %v114
    %590 = vmatprep.subr.mxu0 0.0
    %591 = vmatpush1.msra.mxu0 %v115
    %592 = vmatprep.subr.mxu0 0.0
    %593 = vmatpush1.msra.mxu0 %v116
    %594 = vmatprep.subr.mxu0 0.0
    %595 = vmatpush1.msra.mxu0 0.0
    %596 = vmatprep.subr.mxu0 0.0
    %597 = vmatpush1.msra.mxu0 0.0
    %598 = vmatprep.subr.mxu0 0.0
    %599 = vmatpush1.msra.mxu0 0.0
    %600 = vmatprep.subr.mxu0 0.0
    %601 = vmatpush1.msra.mxu0 0.0
    %602 = vmatprep.subr.mxu0 0.0
    %603 = vmatpush1.msra.mxu0 0.0
    %604 = vmatprep.subr.mxu0 0.0
    %605 = vmatpush1.msra.mxu0 0.0
    %606 = vmatprep.subr.mxu0 0.0
    %607 = vmatpush1.msra.mxu0 0.0
    %608 = vmatprep.subr.mxu0 0.0
    %609 = vmatpush1.msra.mxu0 0.0
    %610 = vmatprep.subr.mxu0 0.0
    %611 = vmatpush1.msra.mxu0 0.0
    %612 = vmatprep.subr.mxu0 0.0
    %613 = vmatpush1.msra.mxu0 0.0
    %614 = vmatprep.subr.mxu0 0.0
    %615 = vmatpush1.msra.mxu0 0.0
    %616 = vmatprep.subr.mxu0 0.0
    %617 = vmatpush1.msra.mxu0 0.0
    %618 = vmatprep.subr.mxu0 0.0
    %619 = vmatpush1.msra.mxu0 0.0
    %620 = vmatprep.subr.mxu0 0.0
    %621 = vmatpush1.msra.mxu0 0.0
    %622 = vmatprep.subr.mxu0 0.0
    %623 = vmatpush1.msra.mxu0 0.0
    %624 = vmatprep.subr.mxu0 0.0
    %625 = vmatpush1.msra.mxu0 0.0
    %626 = vmatprep.subr.mxu0 0.0
    %627 = vmatpush1.msra.mxu0 0.0
    %628 = vmatprep.subr.mxu0 0.0
    %629 = vmatpush1.msra.mxu0 0.0
    %630 = vmatprep.subr.mxu0 0.0
    %631 = vmatpush1.msra.mxu0 0.0
    %632 = vmatprep.subr.mxu0 0.0
    %633 = vmatpush1.msra.mxu0 0.0
    %634 = vmatprep.subr.mxu0 0.0
    %635 = vmatpush1.msra.mxu0 0.0
    %636 = vmatprep.subr.mxu0 0.0
    %637 = vmatpush1.msra.mxu0 0.0
    %638 = vmatprep.subr.mxu0 0.0
    %639 = vmatpush1.msra.mxu0 0.0
    %640 = vmatprep.subr.mxu0 0.0
    %641 = vmatpush1.msra.mxu0 0.0
    %642 = vmatprep.subr.mxu0 0.0
    %643 = vmatpush1.msra.mxu0 0.0
    %644 = vmatprep.subr.mxu0 0.0
    %645 = vmatpush1.msra.mxu0 0.0
    %646 = vmatprep.subr.mxu0 0.0
    %647 = vmatpush1.msra.mxu0 0.0
    %648 = vmatprep.subr.mxu0 0.0
    %649 = vmatpush1.msra.mxu0 0.0
    %650 = vmatprep.mubr.f32.mxu0 0.0
    %651 = vmatmul.mubr.f32.gmra.mrb[0].mxu0 %v584
    %v652 = vpop.f32.mrb[0].mxu0
    %v653 = vadd.f32 0.0, %v652
    %v654 = vpop.f32.mrb[0].mxu0
    %655 = vdwg.mxu0
    %v656 = vadd.f32 %v581, %v653
    %v657 = vxor.u32 %v656, 2147483648
    %v658 = vmul.f32 %v657, 1.442695
    %v659 = vpow.pop %v658
    %v660 = vadd.f32 %v659, 1.0
    %v661 = vrcp.pop %v660
    %v662 = vmul.f32 1.0, %v661
    %v663 = vtanh.pop %v656
    %v664 = vld [vmem:[#allocation4] sm:$0xff]
    %666 = vrot.lane.b32.xlu0 %v664, 32
    %v667 = vpop.permute.xlu0 %666
    %v669 = vmul.f32 %v662, %v667
    %671 = vrot.lane.b32.xlu0 %v663, 64
    %v672 = vpop.permute.xlu0 %671
    %v674 = vmul.f32 %v662, %v672
    %676 = vrot.lane.b32.xlu0 %v674, 32
    %v677 = vpop.permute.xlu0 %676
    %v679 = vadd.f32 %v669, %v677
    %v680 = vtanh.pop %v679
    %682 = vrot.lane.b32.xlu0 %v680, 64
    %v683 = vpop.permute.xlu0 %682
    %v685 = vmul.f32 %v662, %v683
    %687 = vrot.lane.b32.xlu0 %v679, 96
    %v688 = vpop.permute.xlu0 %687
    %690 = vst.msk [vmem:[#allocation4] sm:$0xff] %vm110, %v688
    %692 = vrot.lane.b32.xlu0 %v685, 32
    %v693 = vpop.permute.xlu0 %692
    %695 = vst.msk [vmem:[#allocation3] sm:$0xff] %vm110, %v693
    %s696 = scalar_lea.vmem [#allocation2], 40
    %v697 = vld [vmem:[%s696] sm:$0xff]
    %v698 = vld [vmem:[#allocation3] sm:$0xff]
    %v700 = vsel %vm110, %v698, 0
    %702 = vmatprep.subr.mxu0 0.0
    %703 = vmatpush1.msra.mxu0 %v113
    %704 = vmatprep.subr.mxu0 0.0
    %705 = vmatpush1.msra.mxu0 %v114
    %706 = vmatprep.subr.mxu0 0.0
    %707 = vmatpush1.msra.mxu0 %v115
    %708 = vmatprep.subr.mxu0 0.0
    %709 = vmatpush1.msra.mxu0 %v116
    %710 = vmatprep.subr.mxu0 0.0
    %711 = vmatpush1.msra.mxu0 0.0
    %712 = vmatprep.subr.mxu0 0.0
    %713 = vmatpush1.msra.mxu0 0.0
    %714 = vmatprep.subr.mxu0 0.0
    %715 = vmatpush1.msra.mxu0 0.0
    %716 = vmatprep.subr.mxu0 0.0
    %717 = vmatpush1.msra.mxu0 0.0
    %718 = vmatprep.subr.mxu0 0.0
    %719 = vmatpush1.msra.mxu0 0.0
    %720 = vmatprep.subr.mxu0 0.0
    %721 = vmatpush1.msra.mxu0 0.0
    %722 = vmatprep.subr.mxu0 0.0
    %723 = vmatpush1.msra.mxu0 0.0
    %724 = vmatprep.subr.mxu0 0.0
    %725 = vmatpush1.msra.mxu0 0.0
    %726 = vmatprep.subr.mxu0 0.0
    %727 = vmatpush1.msra.mxu0 0.0
    %728 = vmatprep.subr.mxu0 0.0
    %729 = vmatpush1.msra.mxu0 0.0
    %730 = vmatprep.subr.mxu0 0.0
    %731 = vmatpush1.msra.mxu0 0.0
    %732 = vmatprep.subr.mxu0 0.0
    %733 = vmatpush1.msra.mxu0 0.0
    %734 = vmatprep.subr.mxu0 0.0
    %735 = vmatpush1.msra.mxu0 0.0
    %736 = vmatprep.subr.mxu0 0.0
    %737 = vmatpush1.msra.mxu0 0.0
    %738 = vmatprep.subr.mxu0 0.0
    %739 = vmatpush1.msra.mxu0 0.0
    %740 = vmatprep.subr.mxu0 0.0
    %741 = vmatpush1.msra.mxu0 0.0
    %742 = vmatprep.subr.mxu0 0.0
    %743 = vmatpush1.msra.mxu0 0.0
    %744 = vmatprep.subr.mxu0 0.0
    %745 = vmatpush1.msra.mxu0 0.0
    %746 = vmatprep.subr.mxu0 0.0
    %747 = vmatpush1.msra.mxu0 0.0
    %748 = vmatprep.subr.mxu0 0.0
    %749 = vmatpush1.msra.mxu0 0.0
    %750 = vmatprep.subr.mxu0 0.0
    %751 = vmatpush1.msra.mxu0 0.0
    %752 = vmatprep.subr.mxu0 0.0
    %753 = vmatpush1.msra.mxu0 0.0
    %754 = vmatprep.subr.mxu0 0.0
    %755 = vmatpush1.msra.mxu0 0.0
    %756 = vmatprep.subr.mxu0 0.0
    %757 = vmatpush1.msra.mxu0 0.0
    %758 = vmatprep.subr.mxu0 0.0
    %759 = vmatpush1.msra.mxu0 0.0
    %760 = vmatprep.subr.mxu0 0.0
    %761 = vmatpush1.msra.mxu0 0.0
    %762 = vmatprep.subr.mxu0 0.0
    %763 = vmatpush1.msra.mxu0 0.0
    %764 = vmatprep.subr.mxu0 0.0
    %765 = vmatpush1.msra.mxu0 0.0
    %766 = vmatprep.mubr.f32.mxu0 0.0
    %767 = vmatmul.mubr.f32.gmra.mrb[0].mxu0 %v700
    %v768 = vpop.f32.mrb[0].mxu0
    %v769 = vadd.f32 0.0, %v768
    %v770 = vpop.f32.mrb[0].mxu0
    %771 = vdwg.mxu0
    %v772 = vadd.f32 %v697, %v769
    %v773 = vxor.u32 %v772, 2147483648
    %v774 = vmul.f32 %v773, 1.442695
    %v775 = vpow.pop %v774
    %v776 = vadd.f32 %v775, 1.0
    %v777 = vrcp.pop %v776
    %v778 = vmul.f32 1.0, %v777
    %v779 = vtanh.pop %v772
    %v780 = vld [vmem:[#allocation4] sm:$0xff]
    %782 = vrot.lane.b32.xlu0 %v780, 32
    %v783 = vpop.permute.xlu0 %782
    %v785 = vmul.f32 %v778, %v783
    %787 = vrot.lane.b32.xlu0 %v779, 64
    %v788 = vpop.permute.xlu0 %787
    %v790 = vmul.f32 %v778, %v788
    %792 = vrot.lane.b32.xlu0 %v790, 32
    %v793 = vpop.permute.xlu0 %792
    %v795 = vadd.f32 %v785, %v793
    %v796 = vtanh.pop %v795
    %798 = vrot.lane.b32.xlu0 %v796, 64
    %v799 = vpop.permute.xlu0 %798
    %v801 = vmul.f32 %v778, %v799
    %803 = vrot.lane.b32.xlu0 %v795, 96
    %v804 = vpop.permute.xlu0 %803
    %806 = vst.msk [vmem:[#allocation4] sm:$0xff] %vm110, %v804
    %808 = vrot.lane.b32.xlu0 %v801, 32
    %v809 = vpop.permute.xlu0 %808
    %811 = vst.msk [vmem:[#allocation3] sm:$0xff] %vm110, %v809
    %s812 = scalar_lea.vmem [#allocation2], 48
    %v813 = vld [vmem:[%s812] sm:$0xff]
    %v814 = vld [vmem:[#allocation3] sm:$0xff]
    %v816 = vsel %vm110, %v814, 0
    %818 = vmatprep.subr.mxu0 0.0
    %819 = vmatpush1.msra.mxu0 %v113
    %820 = vmatprep.subr.mxu0 0.0
    %821 = vmatpush1.msra.mxu0 %v114
    %822 = vmatprep.subr.mxu0 0.0
    %823 = vmatpush1.msra.mxu0 %v115
    %824 = vmatprep.subr.mxu0 0.0
    %825 = vmatpush1.msra.mxu0 %v116
    %826 = vmatprep.subr.mxu0 0.0
    %827 = vmatpush1.msra.mxu0 0.0
    %828 = vmatprep.subr.mxu0 0.0
    %829 = vmatpush1.msra.mxu0 0.0
    %830 = vmatprep.subr.mxu0 0.0
    %831 = vmatpush1.msra.mxu0 0.0
    %832 = vmatprep.subr.mxu0 0.0
    %833 = vmatpush1.msra.mxu0 0.0
    %834 = vmatprep.subr.mxu0 0.0
    %835 = vmatpush1.msra.mxu0 0.0
    %836 = vmatprep.subr.mxu0 0.0
    %837 = vmatpush1.msra.mxu0 0.0
    %838 = vmatprep.subr.mxu0 0.0
    %839 = vmatpush1.msra.mxu0 0.0
    %840 = vmatprep.subr.mxu0 0.0
    %841 = vmatpush1.msra.mxu0 0.0
    %842 = vmatprep.subr.mxu0 0.0
    %843 = vmatpush1.msra.mxu0 0.0
    %844 = vmatprep.subr.mxu0 0.0
    %845 = vmatpush1.msra.mxu0 0.0
    %846 = vmatprep.subr.mxu0 0.0
    %847 = vmatpush1.msra.mxu0 0.0
    %848 = vmatprep.subr.mxu0 0.0
    %849 = vmatpush1.msra.mxu0 0.0
    %850 = vmatprep.subr.mxu0 0.0
    %851 = vmatpush1.msra.mxu0 0.0
    %852 = vmatprep.subr.mxu0 0.0
    %853 = vmatpush1.msra.mxu0 0.0
    %854 = vmatprep.subr.mxu0 0.0
    %855 = vmatpush1.msra.mxu0 0.0
    %856 = vmatprep.subr.mxu0 0.0
    %857 = vmatpush1.msra.mxu0 0.0
    %858 = vmatprep.subr.mxu0 0.0
    %859 = vmatpush1.msra.mxu0 0.0
    %860 = vmatprep.subr.mxu0 0.0
    %861 = vmatpush1.msra.mxu0 0.0
    %862 = vmatprep.subr.mxu0 0.0
    %863 = vmatpush1.msra.mxu0 0.0
    %864 = vmatprep.subr.mxu0 0.0
    %865 = vmatpush1.msra.mxu0 0.0
    %866 = vmatprep.subr.mxu0 0.0
    %867 = vmatpush1.msra.mxu0 0.0
    %868 = vmatprep.subr.mxu0 0.0
    %869 = vmatpush1.msra.mxu0 0.0
    %870 = vmatprep.subr.mxu0 0.0
    %871 = vmatpush1.msra.mxu0 0.0
    %872 = vmatprep.subr.mxu0 0.0
    %873 = vmatpush1.msra.mxu0 0.0
    %874 = vmatprep.subr.mxu0 0.0
    %875 = vmatpush1.msra.mxu0 0.0
    %876 = vmatprep.subr.mxu0 0.0
    %877 = vmatpush1.msra.mxu0 0.0
    %878 = vmatprep.subr.mxu0 0.0
    %879 = vmatpush1.msra.mxu0 0.0
    %880 = vmatprep.subr.mxu0 0.0
    %881 = vmatpush1.msra.mxu0 0.0
    %882 = vmatprep.mubr.f32.mxu0 0.0
    %883 = vmatmul.mubr.f32.gmra.mrb[0].mxu0 %v816
    %v884 = vpop.f32.mrb[0].mxu0
    %v885 = vadd.f32 0.0, %v884
    %v886 = vpop.f32.mrb[0].mxu0
    %887 = vdwg.mxu0
    %v888 = vadd.f32 %v813, %v885
    %v889 = vxor.u32 %v888, 2147483648
    %v890 = vmul.f32 %v889, 1.442695
    %v891 = vpow.pop %v890
    %v892 = vadd.f32 %v891, 1.0
    %v893 = vrcp.pop %v892
    %v894 = vmul.f32 1.0, %v893
    %v895 = vtanh.pop %v888
    %v896 = vld [vmem:[#allocation4] sm:$0xff]
    %898 = vrot.lane.b32.xlu0 %v896, 32
    %v899 = vpop.permute.xlu0 %898
    %v901 = vmul.f32 %v894, %v899
    %903 = vrot.lane.b32.xlu0 %v895, 64
    %v904 = vpop.permute.xlu0 %903
    %v906 = vmul.f32 %v894, %v904
    %908 = vrot.lane.b32.xlu0 %v906, 32
    %v909 = vpop.permute.xlu0 %908
    %v911 = vadd.f32 %v901, %v909
    %v912 = vtanh.pop %v911
    %914 = vrot.lane.b32.xlu0 %v912, 64
    %v915 = vpop.permute.xlu0 %914
    %v917 = vmul.f32 %v894, %v915
    %919 = vrot.lane.b32.xlu0 %v911, 96
    %v920 = vpop.permute.xlu0 %919
    %922 = vst.msk [vmem:[#allocation4] sm:$0xff] %vm110, %v920
    %924 = vrot.lane.b32.xlu0 %v917, 32
    %v925 = vpop.permute.xlu0 %924
    %927 = vst.msk [vmem:[#allocation3] sm:$0xff] %vm110, %v925
    %s928 = scalar_lea.vmem [#allocation2], 56
    %v929 = vld [vmem:[%s928] sm:$0xff]
    %v930 = vld [vmem:[#allocation3] sm:$0xff]
    %v932 = vsel %vm110, %v930, 0
    %934 = vmatprep.subr.mxu0 0.0
    %935 = vmatpush1.msra.mxu0 %v113
    %936 = vmatprep.subr.mxu0 0.0
    %937 = vmatpush1.msra.mxu0 %v114
    %938 = vmatprep.subr.mxu0 0.0
    %939 = vmatpush1.msra.mxu0 %v115
    %940 = vmatprep.subr.mxu0 0.0
    %941 = vmatpush1.msra.mxu0 %v116
    %942 = vmatprep.subr.mxu0 0.0
    %943 = vmatpush1.msra.mxu0 0.0
    %944 = vmatprep.subr.mxu0 0.0
    %945 = vmatpush1.msra.mxu0 0.0
    %946 = vmatprep.subr.mxu0 0.0
    %947 = vmatpush1.msra.mxu0 0.0
    %948 = vmatprep.subr.mxu0 0.0
    %949 = vmatpush1.msra.mxu0 0.0
    %950 = vmatprep.subr.mxu0 0.0
    %951 = vmatpush1.msra.mxu0 0.0
    %952 = vmatprep.subr.mxu0 0.0
    %953 = vmatpush1.msra.mxu0 0.0
    %954 = vmatprep.subr.mxu0 0.0
    %955 = vmatpush1.msra.mxu0 0.0
    %956 = vmatprep.subr.mxu0 0.0
    %957 = vmatpush1.msra.mxu0 0.0
    %958 = vmatprep.subr.mxu0 0.0
    %959 = vmatpush1.msra.mxu0 0.0
    %960 = vmatprep.subr.mxu0 0.0
    %961 = vmatpush1.msra.mxu0 0.0
    %962 = vmatprep.subr.mxu0 0.0
    %963 = vmatpush1.msra.mxu0 0.0
    %964 = vmatprep.subr.mxu0 0.0
    %965 = vmatpush1.msra.mxu0 0.0
    %966 = vmatprep.subr.mxu0 0.0
    %967 = vmatpush1.msra.mxu0 0.0
    %968 = vmatprep.subr.mxu0 0.0
    %969 = vmatpush1.msra.mxu0 0.0
    %970 = vmatprep.subr.mxu0 0.0
    %971 = vmatpush1.msra.mxu0 0.0
    %972 = vmatprep.subr.mxu0 0.0
    %973 = vmatpush1.msra.mxu0 0.0
    %974 = vmatprep.subr.mxu0 0.0
    %975 = vmatpush1.msra.mxu0 0.0
    %976 = vmatprep.subr.mxu0 0.0
    %977 = vmatpush1.msra.mxu0 0.0
    %978 = vmatprep.subr.mxu0 0.0
    %979 = vmatpush1.msra.mxu0 0.0
    %980 = vmatprep.subr.mxu0 0.0
    %981 = vmatpush1.msra.mxu0 0.0
    %982 = vmatprep.subr.mxu0 0.0
    %983 = vmatpush1.msra.mxu0 0.0
    %984 = vmatprep.subr.mxu0 0.0
    %985 = vmatpush1.msra.mxu0 0.0
    %986 = vmatprep.subr.mxu0 0.0
    %987 = vmatpush1.msra.mxu0 0.0
    %988 = vmatprep.subr.mxu0 0.0
    %989 = vmatpush1.msra.mxu0 0.0
    %990 = vmatprep.subr.mxu0 0.0
    %991 = vmatpush1.msra.mxu0 0.0
    %992 = vmatprep.subr.mxu0 0.0
    %993 = vmatpush1.msra.mxu0 0.0
    %994 = vmatprep.subr.mxu0 0.0
    %995 = vmatpush1.msra.mxu0 0.0
    %996 = vmatprep.subr.mxu0 0.0
    %997 = vmatpush1.msra.mxu0 0.0
    %998 = vmatprep.mubr.f32.mxu0 0.0
    %999 = vmatmul.mubr.f32.gmra.mrb[0].mxu0 %v932
    %v1000 = vpop.f32.mrb[0].mxu0
    %v1001 = vadd.f32 0.0, %v1000
    %v1002 = vpop.f32.mrb[0].mxu0
    %1003 = vdwg.mxu0
    %v1004 = vadd.f32 %v929, %v1001
    %v1005 = vxor.u32 %v1004, 2147483648
    %v1006 = vmul.f32 %v1005, 1.442695
    %v1007 = vpow.pop %v1006
    %v1008 = vadd.f32 %v1007, 1.0
    %v1009 = vrcp.pop %v1008
    %v1010 = vmul.f32 1.0, %v1009
    %v1011 = vtanh.pop %v1004
    %v1012 = vld [vmem:[#allocation4] sm:$0xff]
    %1014 = vrot.lane.b32.xlu0 %v1012, 32
    %v1015 = vpop.permute.xlu0 %1014
    %v1017 = vmul.f32 %v1010, %v1015
    %1019 = vrot.lane.b32.xlu0 %v1011, 64
    %v1020 = vpop.permute.xlu0 %1019
    %v1022 = vmul.f32 %v1010, %v1020
    %1024 = vrot.lane.b32.xlu0 %v1022, 32
    %v1025 = vpop.permute.xlu0 %1024
    %v1027 = vadd.f32 %v1017, %v1025
    %v1028 = vtanh.pop %v1027
    %1030 = vrot.lane.b32.xlu0 %v1028, 64
    %v1031 = vpop.permute.xlu0 %1030
    %v1033 = vmul.f32 %v1010, %v1031
    %1035 = vrot.lane.b32.xlu0 %v1027, 96
    %v1036 = vpop.permute.xlu0 %1035
    %1038 = vst.msk [vmem:[#allocation4] sm:$0xff] %vm110, %v1036
    %1040 = vrot.lane.b32.xlu0 %v1033, 32
    %v1041 = vpop.permute.xlu0 %1040
    %1043 = vst.msk [vmem:[#allocation3] sm:$0xff] %vm110, %v1041
    %v1044 = vld [vmem:[#allocation3] sm:$0xff]
    %v1045 = vld [vmem:[%s4] sm:$0xff]
    %v1046 = vld [vmem:[%s4 + $0x8] sm:$0xff]
    %v1047 = vld [vmem:[%s4 + $0x10] sm:$0xff]
    %v1048 = vld [vmem:[%s4 + $0x18] sm:$0xff]
    %v1049 = vld [vmem:[%s5] sm:$0x1]
    %v1051 = vlaneseq
    %v1052 = vshrl.u32 %v1051, 7
    %v1053 = vsub.s32 0, %v1052
    %v1054 = vrot.slane %v1049, %v1053
    %v1057 = vsel %vm110, %v1044, 0
    %1059 = vmatprep.subr.mxu0 0.0
    %1060 = vmatpush1.msra.mxu0 %v1045
    %1061 = vmatprep.subr.mxu0 0.0
    %1062 = vmatpush1.msra.mxu0 %v1046
    %1063 = vmatprep.subr.mxu0 0.0
    %1064 = vmatpush1.msra.mxu0 %v1047
    %1065 = vmatprep.subr.mxu0 0.0
    %1066 = vmatpush1.msra.mxu0 %v1048
    %1067 = vmatprep.subr.mxu0 0.0
    %1068 = vmatpush1.msra.mxu0 0.0
    %1069 = vmatprep.subr.mxu0 0.0
    %1070 = vmatpush1.msra.mxu0 0.0
    %1071 = vmatprep.subr.mxu0 0.0
    %1072 = vmatpush1.msra.mxu0 0.0
    %1073 = vmatprep.subr.mxu0 0.0
    %1074 = vmatpush1.msra.mxu0 0.0
    %1075 = vmatprep.subr.mxu0 0.0
    %1076 = vmatpush1.msra.mxu0 0.0
    %1077 = vmatprep.subr.mxu0 0.0
    %1078 = vmatpush1.msra.mxu0 0.0
    %1079 = vmatprep.subr.mxu0 0.0
    %1080 = vmatpush1.msra.mxu0 0.0
    %1081 = vmatprep.subr.mxu0 0.0
    %1082 = vmatpush1.msra.mxu0 0.0
    %1083 = vmatprep.subr.mxu0 0.0
    %1084 = vmatpush1.msra.mxu0 0.0
    %1085 = vmatprep.subr.mxu0 0.0
    %1086 = vmatpush1.msra.mxu0 0.0
    %1087 = vmatprep.subr.mxu0 0.0
    %1088 = vmatpush1.msra.mxu0 0.0
    %1089 = vmatprep.subr.mxu0 0.0
    %1090 = vmatpush1.msra.mxu0 0.0
    %1091 = vmatprep.subr.mxu0 0.0
    %1092 = vmatpush1.msra.mxu0 0.0
    %1093 = vmatprep.subr.mxu0 0.0
    %1094 = vmatpush1.msra.mxu0 0.0
    %1095 = vmatprep.subr.mxu0 0.0
    %1096 = vmatpush1.msra.mxu0 0.0
    %1097 = vmatprep.subr.mxu0 0.0
    %1098 = vmatpush1.msra.mxu0 0.0
    %1099 = vmatprep.subr.mxu0 0.0
    %1100 = vmatpush1.msra.mxu0 0.0
    %1101 = vmatprep.subr.mxu0 0.0
    %1102 = vmatpush1.msra.mxu0 0.0
    %1103 = vmatprep.subr.mxu0 0.0
    %1104 = vmatpush1.msra.mxu0 0.0
    %1105 = vmatprep.subr.mxu0 0.0
    %1106 = vmatpush1.msra.mxu0 0.0
    %1107 = vmatprep.subr.mxu0 0.0
    %1108 = vmatpush1.msra.mxu0 0.0
    %1109 = vmatprep.subr.mxu0 0.0
    %1110 = vmatpush1.msra.mxu0 0.0
    %1111 = vmatprep.subr.mxu0 0.0
    %1112 = vmatpush1.msra.mxu0 0.0
    %1113 = vmatprep.subr.mxu0 0.0
    %1114 = vmatpush1.msra.mxu0 0.0
    %1115 = vmatprep.subr.mxu0 0.0
    %1116 = vmatpush1.msra.mxu0 0.0
    %1117 = vmatprep.subr.mxu0 0.0
    %1118 = vmatpush1.msra.mxu0 0.0
    %1119 = vmatprep.subr.mxu0 0.0
    %1120 = vmatpush1.msra.mxu0 0.0
    %1121 = vmatprep.subr.mxu0 0.0
    %1122 = vmatpush1.msra.mxu0 0.0
    %1123 = vmatprep.mubr.f32.mxu0 0.0
    %1124 = vmatmul.mubr.f32.gmra.mrb[0].mxu0 %v1057
    %v1125 = vpop.f32.mrb[0].mxu0
    %v1126 = vadd.f32 %v1054, %v1125
    %v1127 = vpop.f32.mrb[0].mxu0
    %1128 = vdwg.mxu0
    %1129 = vst [vmem:[#allocation5] sm:$0xff] %v1126
    // Predicated region
    $region26: #{tpu_custom_call.1} parent=1 // pred_check
      _
    $region27: #{tpu_custom_call.1} parent=1 // pred_check_branch
      %1131 = sbr.rel (0) target = $region29
    $region28: #{tpu_custom_call.1} parent=1 // pred_region
      %s1133 = ssub.s32 128, 128
      %1134 = vsyncadd [#allocation6], %s1133
      %s1136 = sshll.u32 [#allocation5], 4
      %s1137 = int_to_ptr.vmem [resolvable:$true] %s1136
      %1139 = dma.vmem_to_hbm [thread:$0]  %s1137, 128, %s6, [#allocation6]
    $region29: #{tpu_custom_call.1} parent=1 // pred_fallthru
      _
    // Predicated region
    $region30: #{tpu_custom_call.1} parent=1 // pred_check
      _
    $region31: #{tpu_custom_call.1} parent=1 // pred_check_branch
      %1141 = sbr.rel (0) target = $region33
    $region32: #{tpu_custom_call.1} parent=1 // pred_region
      %1142 = dma.done [#allocation6], 128
    $region33: #{tpu_custom_call.1} parent=1 // pred_fallthru
      _
    %1143 = vsyncpa [#allocation6], 1

</llo_original>
